<compile_context>
chip_gen: v7x
topology: tpu7x:2x2x1
jax: 0.10.0
libtpu: 0.0.40
codegen_flags: <defaults>
</compile_context>

<pallas_src>
import functools

import jax
import jax.numpy as jnp
from jax.experimental import pallas as pl
from jax.experimental.pallas import tpu as pltpu


def _peg_kernel(x0_ref, x1_ref, x2_ref, w_ref, b_ref, o_ref, xpad_ref, *,
                f_total, pad_front, h_block):
    """One output frame, one channel tile.

    x0/x1/x2_ref: (H, W, TC)  clamped views of input frames f+kf-pad_front
    w_ref:        (3, 3, 3, TC) depthwise taps (channels-last)
    b_ref:        (1, TC)     bias
    o_ref:        (H, W, TC)  output frame
    xpad_ref:     (3, H+2, W+2, TC) f32 zero-bordered staging slab (VMEM scratch)
    """
    H, W, TC = o_ref.shape
    f = pl.program_id(1)

    # ---- hoisted per-step prep (outside the tap / chunk loops) -------------
    bias = b_ref[0, :].astype(jnp.float32)                       # (TC,)

    # Tap kf reads input frame f + kf - pad_front. The clamped BlockSpec view
    # loads a real frame at the boundaries, so zero its tap weights instead.
    taps = []
    for kf in range(3):
        off = kf - pad_front
        if off == 0:
            valid = None                                         # always in range
        else:
            src = f + off
            valid = jnp.logical_and(src >= 0, src <= f_total - 1)
            valid = valid.astype(jnp.float32)
        rows = []
        for kh in range(3):
            cols = []
            for kw in range(3):
                tap = w_ref[kf, kh, kw, :].astype(jnp.float32)   # (TC,)
                if valid is not None:
                    tap = tap * valid
                cols.append(tap)
            rows.append(cols)
        taps.append(rows)

    # ---- stage the three frames into the zero-bordered slab ----------------
    xpad_ref[...] = jnp.zeros(xpad_ref.shape, jnp.float32)
    frame_refs = (x0_ref, x1_ref, x2_ref)
    for kf in range(3):
        xpad_ref[kf, 1:H + 1, 1:W + 1, :] = frame_refs[kf][...].astype(jnp.float32)

    # ---- accumulate, one H-chunk at a time ----------------------------------
    for h0 in range(0, H, h_block):
        hb = min(h_block, H - h0)
        acc = jnp.broadcast_to(bias, (hb, W, TC))                # bias folded in
        for kf in range(3):
            for kw in range(3):
                # one sublane-shifted load per (frame, kw); reused for all kh
                xw = xpad_ref[kf, h0:h0 + hb + 2, kw:kw + W, :]  # (hb+2, W, TC)
                for kh in range(3):
                    acc = acc + xw[kh:kh + hb, :, :] * taps[kf][kh][kw]
        o_ref[h0:h0 + hb, :, :] = acc.astype(o_ref.dtype)


def peg_dsconv(x, weight, bias, *, causal=False):
    """Depthwise 3x3x3 'same' conv of PEG on a (B, F, H, W, C) tensor."""
    B, F_, H, W, C = x.shape
    pad_front = 2 if causal else 1

    # Channel tile: multiple of 128 (lane-dense stores) when possible, else full C.
    if C % 128 == 0:
        tc = 128
        while C % (tc * 2) == 0 and H * W * (tc * 2) * x.dtype.itemsize <= (2 << 20):
            tc *= 2
    else:
        tc = C          # legal (block == full dim); stores are masked if C < 128
    num_c = C // tc

    # Bound the in-kernel accumulator to ~96 KiB worth of rows.
    row_bytes = max(W * tc * 4, 1)
    h_block = int(max(1, min(H, (96 * 1024) // row_bytes)))

    # PyTorch depthwise weight (C, 1, 3, 3, 3) -> (3, 3, 3, C) channels-last.
    w = jnp.transpose(weight[:, 0], (1, 2, 3, 0))
    b2 = bias.reshape(1, C)

    def x_spec(kf):
        off = kf - pad_front

        def idx(bb, ff, cc):
            return (bb, jnp.clip(ff + off, 0, F_ - 1), 0, 0, cc)

        return pl.BlockSpec((None, None, H, W, tc), idx)

    in_specs = [
        x_spec(0), x_spec(1), x_spec(2),
        pl.BlockSpec((3, 3, 3, tc), lambda bb, ff, cc: (0, 0, 0, cc)),
        pl.BlockSpec((1, tc), lambda bb, ff, cc: (0, cc)),
    ]
    out_spec = pl.BlockSpec((None, None, H, W, tc),
                            lambda bb, ff, cc: (bb, ff, 0, 0, cc))

    # Explicit VMEM budget: 3 input views + 1 output block, double buffered,
    # plus the f32 staging scratch. Capped well below v7x's 64 MiB.
    blk = H * W * tc * x.dtype.itemsize
    w_blk = 27 * tc * w.dtype.itemsize
    b_blk = tc * b2.dtype.itemsize
    scratch_bytes = 3 * (H + 2) * (W + 2) * tc * 4
    needed = 2 * (3 * blk + blk + w_blk + b_blk) + scratch_bytes
    vmem_limit = int(min(max(needed + (8 << 20), 16 << 20), 56 << 20))

    kernel = functools.partial(_peg_kernel, f_total=F_, pad_front=pad_front,
                               h_block=h_block)

    return pl.pallas_call(
        kernel,
        out_shape=jax.ShapeDtypeStruct((B, F_, H, W, C), x.dtype),
        grid_spec=pltpu.PrefetchScalarGridSpec(
            num_scalar_prefetch=0,
            grid=(B, F_, num_c),
            in_specs=in_specs,
            out_specs=out_spec,
            scratch_shapes=[pltpu.VMEM((3, H + 2, W + 2, tc), jnp.float32)],
        ),
        compiler_params=pltpu.CompilerParams(
            dimension_semantics=("parallel", "parallel", "arbitrary"),
            vmem_limit_bytes=vmem_limit,
        ),
    )(x, x, x, w, b2)


def peg_forward(x, weight, bias, *, causal=False, shape=None):
    """Full PEG.forward semantics.

    x: (B, F, H, W, C) channels-last, or (B, N, C) with shape=(B, F, H, W).
    Returns a tensor with the same shape as x.
    """
    needs_shape = x.ndim == 3
    assert not (needs_shape and shape is None)
    orig_shape = x.shape
    if needs_shape:
        B, F_, H, W = shape
        x = x.reshape(B, F_, H, W, -1)
    y = peg_dsconv(x, weight, bias, causal=causal)
    return y.reshape(orig_shape)


def _reference_peg(x_bfhwc, weight_cfhw, bias_c, causal=False):
    """Pure-JAX reference (explicit pad + tap loop) for verification."""
    frame_padding = (2, 0) if causal else (1, 1)
    xp = jnp.pad(x_bfhwc, ((0, 0), frame_padding, (1, 1), (1, 1), (0, 0)))
    B, F_, H, W, C = x_bfhwc.shape
    w = jnp.transpose(weight_cfhw[:, 0], (1, 2, 3, 0))
    acc = jnp.zeros((B, F_, H, W, C), jnp.float32)
    for kf in range(3):
        for kh in range(3):
            for kw in range(3):
                acc = acc + xp[:, kf:kf + F_, kh:kh + H, kw:kw + W, :] * w[kf, kh, kw, :]
    return (acc + bias_c).astype(x_bfhwc.dtype)


if __name__ == "__main__":
    key = jax.random.PRNGKey(0)
    k1, k2, k3, k4, k5, k6 = jax.random.split(key, 6)

    fan_in = 1 * 3 * 3 * 3
    bound = 1.0 / (fan_in ** 0.5)

    # --- config 1: toy shapes, non-causal; also the 3-D (b, n, d) path ------
    B, F_, H, W, C = 2, 4, 6, 6, 16
    x = jax.random.normal(k1, (B, F_, H, W, C), jnp.float32)
    weight = jax.random.uniform(k2, (C, 1, 3, 3, 3), jnp.float32, -bound, bound)
    bias = jax.random.uniform(k3, (C,), jnp.float32, -bound, bound)

    out5 = jax.block_until_ready(peg_forward(x, weight, bias, causal=False))
    x3 = x.reshape(B, F_ * H * W, C)
    out3 = jax.block_until_ready(
        peg_forward(x3, weight, bias, causal=False, shape=(B, F_, H, W)))

    ref = _reference_peg(x, weight, bias, causal=False)
    assert out5.shape == x.shape
    assert out3.shape == x3.shape
    assert jnp.allclose(out5, ref, atol=1e-5, rtol=1e-5)
    assert jnp.allclose(out3.reshape(B, F_, H, W, C), ref, atol=1e-5, rtol=1e-5)

    # --- config 2: causal, multiple channel tiles + multiple H chunks -------
    B2, F2, H2, W2, C2 = 1, 3, 10, 24, 384
    x2 = jax.random.normal(k4, (B2, F2, H2, W2, C2), jnp.float32)
    weight2 = jax.random.uniform(k5, (C2, 1, 3, 3, 3), jnp.float32, -bound, bound)
    bias2 = jax.random.uniform(k6, (C2,), jnp.float32, -bound, bound)

    out2 = jax.block_until_ready(peg_forward(x2, weight2, bias2, causal=True))
    ref2 = _reference_peg(x2, weight2, bias2, causal=True)
    assert out2.shape == x2.shape
    assert jnp.allclose(out2, ref2, atol=1e-5, rtol=1e-5)

    print("KERNEL_OK")
</pallas_src>

<mosaic_0001>
module attributes {stable_mosaic.version = 11 : i64} {
  func.func @_peg_kernel(%arg0: i32, %arg1: i32, %arg2: i32, %arg3: memref<1x1x6x6x16xf32, #tpu.memory_space<vmem>>, %arg4: memref<1x1x6x6x16xf32, #tpu.memory_space<vmem>>, %arg5: memref<1x1x6x6x16xf32, #tpu.memory_space<vmem>>, %arg6: memref<3x3x3x16xf32, #tpu.memory_space<vmem>>, %arg7: memref<1x16xf32, #tpu.memory_space<vmem>>, %arg8: memref<1x1x6x6x16xf32, #tpu.memory_space<vmem>>, %arg9: memref<3x8x8x16xf32, #tpu.memory_space<vmem>>) attributes {dimension_semantics = [#tpu.dimension_semantics<parallel>, #tpu.dimension_semantics<parallel>, #tpu.dimension_semantics<arbitrary>], iteration_bounds = array<i64: 2, 4, 1>, scalar_prefetch = 0 : i64, scratch_operands = 1 : i64, tpu.core_type = #tpu.core_type<tc>, window_params = [{transform_indices = @transform_0, window_bounds = array<i64: 1, 1, 6, 6, 16>}, {transform_indices = @transform_1, window_bounds = array<i64: 1, 1, 6, 6, 16>}, {transform_indices = @transform_2, window_bounds = array<i64: 1, 1, 6, 6, 16>}, {transform_indices = @transform_3, window_bounds = array<i64: 3, 3, 3, 16>}, {transform_indices = @transform_4, window_bounds = array<i64: 1, 16>}, {transform_indices = @transform_5, window_bounds = array<i64: 1, 1, 6, 6, 16>}]} {
    %c0 = arith.constant 0 : index
    %c0_0 = arith.constant 0 : index
    %0 = vector.load %arg7[%c0, %c0_0] : memref<1x16xf32, #tpu.memory_space<vmem>>, vector<1x16xf32>
    %1 = vector.shape_cast %0 : vector<1x16xf32> to vector<16xf32>
    %c-1_i32 = arith.constant -1 : i32
    %2 = arith.addi %arg1, %c-1_i32 : i32
    %c0_i32 = arith.constant 0 : i32
    %3 = arith.cmpi sge, %2, %c0_i32 : i32
    %c3_i32 = arith.constant 3 : i32
    %4 = arith.cmpi sle, %2, %c3_i32 : i32
    %5 = arith.andi %3, %4 : i1
    %6 = arith.extui %5 : i1 to i32
    %7 = arith.sitofp %6 : i32 to f32
    %c0_1 = arith.constant 0 : index
    %c0_2 = arith.constant 0 : index
    %c0_3 = arith.constant 0 : index
    %c0_4 = arith.constant 0 : index
    %8 = vector.load %arg6[%c0_1, %c0_2, %c0_3, %c0_4] : memref<3x3x3x16xf32, #tpu.memory_space<vmem>>, vector<1x1x1x16xf32>
    %9 = vector.shape_cast %8 : vector<1x1x1x16xf32> to vector<16xf32>
    %10 = vector.broadcast %7 : f32 to vector<16xf32>
    %11 = arith.mulf %9, %10 : vector<16xf32>
    %c0_5 = arith.constant 0 : index
    %c0_6 = arith.constant 0 : index
    %c1 = arith.constant 1 : index
    %c0_7 = arith.constant 0 : index
    %12 = vector.load %arg6[%c0_5, %c0_6, %c1, %c0_7] : memref<3x3x3x16xf32, #tpu.memory_space<vmem>>, vector<1x1x1x16xf32>
    %13 = vector.shape_cast %12 : vector<1x1x1x16xf32> to vector<16xf32>
    %14 = vector.broadcast %7 : f32 to vector<16xf32>
    %15 = arith.mulf %13, %14 : vector<16xf32>
    %c0_8 = arith.constant 0 : index
    %c0_9 = arith.constant 0 : index
    %c2 = arith.constant 2 : index
    %c0_10 = arith.constant 0 : index
    %16 = vector.load %arg6[%c0_8, %c0_9, %c2, %c0_10] : memref<3x3x3x16xf32, #tpu.memory_space<vmem>>, vector<1x1x1x16xf32>
    %17 = vector.shape_cast %16 : vector<1x1x1x16xf32> to vector<16xf32>
    %18 = vector.broadcast %7 : f32 to vector<16xf32>
    %19 = arith.mulf %17, %18 : vector<16xf32>
    %c0_11 = arith.constant 0 : index
    %c1_12 = arith.constant 1 : index
    %c0_13 = arith.constant 0 : index
    %c0_14 = arith.constant 0 : index
    %20 = vector.load %arg6[%c0_11, %c1_12, %c0_13, %c0_14] : memref<3x3x3x16xf32, #tpu.memory_space<vmem>>, vector<1x1x1x16xf32>
    %21 = vector.shape_cast %20 : vector<1x1x1x16xf32> to vector<16xf32>
    %22 = vector.broadcast %7 : f32 to vector<16xf32>
    %23 = arith.mulf %21, %22 : vector<16xf32>
    %c0_15 = arith.constant 0 : index
    %c1_16 = arith.constant 1 : index
    %c1_17 = arith.constant 1 : index
    %c0_18 = arith.constant 0 : index
    %24 = vector.load %arg6[%c0_15, %c1_16, %c1_17, %c0_18] : memref<3x3x3x16xf32, #tpu.memory_space<vmem>>, vector<1x1x1x16xf32>
    %25 = vector.shape_cast %24 : vector<1x1x1x16xf32> to vector<16xf32>
    %26 = vector.broadcast %7 : f32 to vector<16xf32>
    %27 = arith.mulf %25, %26 : vector<16xf32>
    %c0_19 = arith.constant 0 : index
    %c1_20 = arith.constant 1 : index
    %c2_21 = arith.constant 2 : index
    %c0_22 = arith.constant 0 : index
    %28 = vector.load %arg6[%c0_19, %c1_20, %c2_21, %c0_22] : memref<3x3x3x16xf32, #tpu.memory_space<vmem>>, vector<1x1x1x16xf32>
    %29 = vector.shape_cast %28 : vector<1x1x1x16xf32> to vector<16xf32>
    %30 = vector.broadcast %7 : f32 to vector<16xf32>
    %31 = arith.mulf %29, %30 : vector<16xf32>
    %c0_23 = arith.constant 0 : index
    %c2_24 = arith.constant 2 : index
    %c0_25 = arith.constant 0 : index
    %c0_26 = arith.constant 0 : index
    %32 = vector.load %arg6[%c0_23, %c2_24, %c0_25, %c0_26] : memref<3x3x3x16xf32, #tpu.memory_space<vmem>>, vector<1x1x1x16xf32>
    %33 = vector.shape_cast %32 : vector<1x1x1x16xf32> to vector<16xf32>
    %34 = vector.broadcast %7 : f32 to vector<16xf32>
    %35 = arith.mulf %33, %34 : vector<16xf32>
    %c0_27 = arith.constant 0 : index
    %c2_28 = arith.constant 2 : index
    %c1_29 = arith.constant 1 : index
    %c0_30 = arith.constant 0 : index
    %36 = vector.load %arg6[%c0_27, %c2_28, %c1_29, %c0_30] : memref<3x3x3x16xf32, #tpu.memory_space<vmem>>, vector<1x1x1x16xf32>
    %37 = vector.shape_cast %36 : vector<1x1x1x16xf32> to vector<16xf32>
    %38 = vector.broadcast %7 : f32 to vector<16xf32>
    %39 = arith.mulf %37, %38 : vector<16xf32>
    %c0_31 = arith.constant 0 : index
    %c2_32 = arith.constant 2 : index
    %c2_33 = arith.constant 2 : index
    %c0_34 = arith.constant 0 : index
    %40 = vector.load %arg6[%c0_31, %c2_32, %c2_33, %c0_34] : memref<3x3x3x16xf32, #tpu.memory_space<vmem>>, vector<1x1x1x16xf32>
    %41 = vector.shape_cast %40 : vector<1x1x1x16xf32> to vector<16xf32>
    %42 = vector.broadcast %7 : f32 to vector<16xf32>
    %43 = arith.mulf %41, %42 : vector<16xf32>
    %c1_35 = arith.constant 1 : index
    %c0_36 = arith.constant 0 : index
    %c0_37 = arith.constant 0 : index
    %c0_38 = arith.constant 0 : index
    %44 = vector.load %arg6[%c1_35, %c0_36, %c0_37, %c0_38] : memref<3x3x3x16xf32, #tpu.memory_space<vmem>>, vector<1x1x1x16xf32>
    %45 = vector.shape_cast %44 : vector<1x1x1x16xf32> to vector<16xf32>
    %c1_39 = arith.constant 1 : index
    %c0_40 = arith.constant 0 : index
    %c1_41 = arith.constant 1 : index
    %c0_42 = arith.constant 0 : index
    %46 = vector.load %arg6[%c1_39, %c0_40, %c1_41, %c0_42] : memref<3x3x3x16xf32, #tpu.memory_space<vmem>>, vector<1x1x1x16xf32>
    %47 = vector.shape_cast %46 : vector<1x1x1x16xf32> to vector<16xf32>
    %c1_43 = arith.constant 1 : index
    %c0_44 = arith.constant 0 : index
    %c2_45 = arith.constant 2 : index
    %c0_46 = arith.constant 0 : index
    %48 = vector.load %arg6[%c1_43, %c0_44, %c2_45, %c0_46] : memref<3x3x3x16xf32, #tpu.memory_space<vmem>>, vector<1x1x1x16xf32>
    %49 = vector.shape_cast %48 : vector<1x1x1x16xf32> to vector<16xf32>
    %c1_47 = arith.constant 1 : index
    %c1_48 = arith.constant 1 : index
    %c0_49 = arith.constant 0 : index
    %c0_50 = arith.constant 0 : index
    %50 = vector.load %arg6[%c1_47, %c1_48, %c0_49, %c0_50] : memref<3x3x3x16xf32, #tpu.memory_space<vmem>>, vector<1x1x1x16xf32>
    %51 = vector.shape_cast %50 : vector<1x1x1x16xf32> to vector<16xf32>
    %c1_51 = arith.constant 1 : index
    %c1_52 = arith.constant 1 : index
    %c1_53 = arith.constant 1 : index
    %c0_54 = arith.constant 0 : index
    %52 = vector.load %arg6[%c1_51, %c1_52, %c1_53, %c0_54] : memref<3x3x3x16xf32, #tpu.memory_space<vmem>>, vector<1x1x1x16xf32>
    %53 = vector.shape_cast %52 : vector<1x1x1x16xf32> to vector<16xf32>
    %c1_55 = arith.constant 1 : index
    %c1_56 = arith.constant 1 : index
    %c2_57 = arith.constant 2 : index
    %c0_58 = arith.constant 0 : index
    %54 = vector.load %arg6[%c1_55, %c1_56, %c2_57, %c0_58] : memref<3x3x3x16xf32, #tpu.memory_space<vmem>>, vector<1x1x1x16xf32>
    %55 = vector.shape_cast %54 : vector<1x1x1x16xf32> to vector<16xf32>
    %c1_59 = arith.constant 1 : index
    %c2_60 = arith.constant 2 : index
    %c0_61 = arith.constant 0 : index
    %c0_62 = arith.constant 0 : index
    %56 = vector.load %arg6[%c1_59, %c2_60, %c0_61, %c0_62] : memref<3x3x3x16xf32, #tpu.memory_space<vmem>>, vector<1x1x1x16xf32>
    %57 = vector.shape_cast %56 : vector<1x1x1x16xf32> to vector<16xf32>
    %c1_63 = arith.constant 1 : index
    %c2_64 = arith.constant 2 : index
    %c1_65 = arith.constant 1 : index
    %c0_66 = arith.constant 0 : index
    %58 = vector.load %arg6[%c1_63, %c2_64, %c1_65, %c0_66] : memref<3x3x3x16xf32, #tpu.memory_space<vmem>>, vector<1x1x1x16xf32>
    %59 = vector.shape_cast %58 : vector<1x1x1x16xf32> to vector<16xf32>
    %c1_67 = arith.constant 1 : index
    %c2_68 = arith.constant 2 : index
    %c2_69 = arith.constant 2 : index
    %c0_70 = arith.constant 0 : index
    %60 = vector.load %arg6[%c1_67, %c2_68, %c2_69, %c0_70] : memref<3x3x3x16xf32, #tpu.memory_space<vmem>>, vector<1x1x1x16xf32>
    %61 = vector.shape_cast %60 : vector<1x1x1x16xf32> to vector<16xf32>
    %c1_i32 = arith.constant 1 : i32
    %62 = arith.addi %arg1, %c1_i32 : i32
    %c0_i32_71 = arith.constant 0 : i32
    %63 = arith.cmpi sge, %62, %c0_i32_71 : i32
    %c3_i32_72 = arith.constant 3 : i32
    %64 = arith.cmpi sle, %62, %c3_i32_72 : i32
    %65 = arith.andi %63, %64 : i1
    %66 = arith.extui %65 : i1 to i32
    %67 = arith.sitofp %66 : i32 to f32
    %c2_73 = arith.constant 2 : index
    %c0_74 = arith.constant 0 : index
    %c0_75 = arith.constant 0 : index
    %c0_76 = arith.constant 0 : index
    %68 = vector.load %arg6[%c2_73, %c0_74, %c0_75, %c0_76] : memref<3x3x3x16xf32, #tpu.memory_space<vmem>>, vector<1x1x1x16xf32>
    %69 = vector.shape_cast %68 : vector<1x1x1x16xf32> to vector<16xf32>
    %70 = vector.broadcast %67 : f32 to vector<16xf32>
    %71 = arith.mulf %69, %70 : vector<16xf32>
    %c2_77 = arith.constant 2 : index
    %c0_78 = arith.constant 0 : index
    %c1_79 = arith.constant 1 : index
    %c0_80 = arith.constant 0 : index
    %72 = vector.load %arg6[%c2_77, %c0_78, %c1_79, %c0_80] : memref<3x3x3x16xf32, #tpu.memory_space<vmem>>, vector<1x1x1x16xf32>
    %73 = vector.shape_cast %72 : vector<1x1x1x16xf32> to vector<16xf32>
    %74 = vector.broadcast %67 : f32 to vector<16xf32>
    %75 = arith.mulf %73, %74 : vector<16xf32>
    %c2_81 = arith.constant 2 : index
    %c0_82 = arith.constant 0 : index
    %c2_83 = arith.constant 2 : index
    %c0_84 = arith.constant 0 : index
    %76 = vector.load %arg6[%c2_81, %c0_82, %c2_83, %c0_84] : memref<3x3x3x16xf32, #tpu.memory_space<vmem>>, vector<1x1x1x16xf32>
    %77 = vector.shape_cast %76 : vector<1x1x1x16xf32> to vector<16xf32>
    %78 = vector.broadcast %67 : f32 to vector<16xf32>
    %79 = arith.mulf %77, %78 : vector<16xf32>
    %c2_85 = arith.constant 2 : index
    %c1_86 = arith.constant 1 : index
    %c0_87 = arith.constant 0 : index
    %c0_88 = arith.constant 0 : index
    %80 = vector.load %arg6[%c2_85, %c1_86, %c0_87, %c0_88] : memref<3x3x3x16xf32, #tpu.memory_space<vmem>>, vector<1x1x1x16xf32>
    %81 = vector.shape_cast %80 : vector<1x1x1x16xf32> to vector<16xf32>
    %82 = vector.broadcast %67 : f32 to vector<16xf32>
    %83 = arith.mulf %81, %82 : vector<16xf32>
    %c2_89 = arith.constant 2 : index
    %c1_90 = arith.constant 1 : index
    %c1_91 = arith.constant 1 : index
    %c0_92 = arith.constant 0 : index
    %84 = vector.load %arg6[%c2_89, %c1_90, %c1_91, %c0_92] : memref<3x3x3x16xf32, #tpu.memory_space<vmem>>, vector<1x1x1x16xf32>
    %85 = vector.shape_cast %84 : vector<1x1x1x16xf32> to vector<16xf32>
    %86 = vector.broadcast %67 : f32 to vector<16xf32>
    %87 = arith.mulf %85, %86 : vector<16xf32>
    %c2_93 = arith.constant 2 : index
    %c1_94 = arith.constant 1 : index
    %c2_95 = arith.constant 2 : index
    %c0_96 = arith.constant 0 : index
    %88 = vector.load %arg6[%c2_93, %c1_94, %c2_95, %c0_96] : memref<3x3x3x16xf32, #tpu.memory_space<vmem>>, vector<1x1x1x16xf32>
    %89 = vector.shape_cast %88 : vector<1x1x1x16xf32> to vector<16xf32>
    %90 = vector.broadcast %67 : f32 to vector<16xf32>
    %91 = arith.mulf %89, %90 : vector<16xf32>
    %c2_97 = arith.constant 2 : index
    %c2_98 = arith.constant 2 : index
    %c0_99 = arith.constant 0 : index
    %c0_100 = arith.constant 0 : index
    %92 = vector.load %arg6[%c2_97, %c2_98, %c0_99, %c0_100] : memref<3x3x3x16xf32, #tpu.memory_space<vmem>>, vector<1x1x1x16xf32>
    %93 = vector.shape_cast %92 : vector<1x1x1x16xf32> to vector<16xf32>
    %94 = vector.broadcast %67 : f32 to vector<16xf32>
    %95 = arith.mulf %93, %94 : vector<16xf32>
    %c2_101 = arith.constant 2 : index
    %c2_102 = arith.constant 2 : index
    %c1_103 = arith.constant 1 : index
    %c0_104 = arith.constant 0 : index
    %96 = vector.load %arg6[%c2_101, %c2_102, %c1_103, %c0_104] : memref<3x3x3x16xf32, #tpu.memory_space<vmem>>, vector<1x1x1x16xf32>
    %97 = vector.shape_cast %96 : vector<1x1x1x16xf32> to vector<16xf32>
    %98 = vector.broadcast %67 : f32 to vector<16xf32>
    %99 = arith.mulf %97, %98 : vector<16xf32>
    %c2_105 = arith.constant 2 : index
    %c2_106 = arith.constant 2 : index
    %c2_107 = arith.constant 2 : index
    %c0_108 = arith.constant 0 : index
    %100 = vector.load %arg6[%c2_105, %c2_106, %c2_107, %c0_108] : memref<3x3x3x16xf32, #tpu.memory_space<vmem>>, vector<1x1x1x16xf32>
    %101 = vector.shape_cast %100 : vector<1x1x1x16xf32> to vector<16xf32>
    %102 = vector.broadcast %67 : f32 to vector<16xf32>
    %103 = arith.mulf %101, %102 : vector<16xf32>
    %cst = arith.constant 0.000000e+00 : f32
    %104 = vector.broadcast %cst : f32 to vector<3x8x8x16xf32>
    %c0_109 = arith.constant 0 : index
    %c0_110 = arith.constant 0 : index
    %c0_111 = arith.constant 0 : index
    %c0_112 = arith.constant 0 : index
    %105 = vector.load %arg9[%c0_109, %c0_110, %c0_111, %c0_112] : memref<3x8x8x16xf32, #tpu.memory_space<vmem>>, vector<3x8x8x16xf32>
    tpu.vector_store %arg9[%c0_109, %c0_110, %c0_111, %c0_112], %104 {strides = array<i32>} : memref<3x8x8x16xf32, #tpu.memory_space<vmem>>, vector<3x8x8x16xf32>,
    %c0_113 = arith.constant 0 : index
    %c0_114 = arith.constant 0 : index
    %c0_115 = arith.constant 0 : index
    %c0_116 = arith.constant 0 : index
    %c0_117 = arith.constant 0 : index
    %106 = vector.load %arg3[%c0_113, %c0_114, %c0_115, %c0_116, %c0_117] : memref<1x1x6x6x16xf32, #tpu.memory_space<vmem>>, vector<1x1x6x6x16xf32>
    %107 = vector.shape_cast %106 : vector<1x1x6x6x16xf32> to vector<6x6x16xf32>
    %c0_118 = arith.constant 0 : index
    %c1_119 = arith.constant 1 : index
    %c1_120 = arith.constant 1 : index
    %c0_121 = arith.constant 0 : index
    %108 = vector.load %arg9[%c0_118, %c1_119, %c1_120, %c0_121] : memref<3x8x8x16xf32, #tpu.memory_space<vmem>>, vector<1x6x6x16xf32>
    %109 = vector.shape_cast %108 : vector<1x6x6x16xf32> to vector<6x6x16xf32>
    %110 = vector.shape_cast %107 : vector<6x6x16xf32> to vector<1x6x6x16xf32>
    tpu.vector_store %arg9[%c0_118, %c1_119, %c1_120, %c0_121], %110 {strides = array<i32>} : memref<3x8x8x16xf32, #tpu.memory_space<vmem>>, vector<1x6x6x16xf32>,
    %c0_122 = arith.constant 0 : index
    %c0_123 = arith.constant 0 : index
    %c0_124 = arith.constant 0 : index
    %c0_125 = arith.constant 0 : index
    %c0_126 = arith.constant 0 : index
    %111 = vector.load %arg4[%c0_122, %c0_123, %c0_124, %c0_125, %c0_126] : memref<1x1x6x6x16xf32, #tpu.memory_space<vmem>>, vector<1x1x6x6x16xf32>
    %112 = vector.shape_cast %111 : vector<1x1x6x6x16xf32> to vector<6x6x16xf32>
    %c1_127 = arith.constant 1 : index
    %c1_128 = arith.constant 1 : index
    %c1_129 = arith.constant 1 : index
    %c0_130 = arith.constant 0 : index
    %113 = vector.load %arg9[%c1_127, %c1_128, %c1_129, %c0_130] : memref<3x8x8x16xf32, #tpu.memory_space<vmem>>, vector<1x6x6x16xf32>
    %114 = vector.shape_cast %113 : vector<1x6x6x16xf32> to vector<6x6x16xf32>
    %115 = vector.shape_cast %112 : vector<6x6x16xf32> to vector<1x6x6x16xf32>
    tpu.vector_store %arg9[%c1_127, %c1_128, %c1_129, %c0_130], %115 {strides = array<i32>} : memref<3x8x8x16xf32, #tpu.memory_space<vmem>>, vector<1x6x6x16xf32>,
    %c0_131 = arith.constant 0 : index
    %c0_132 = arith.constant 0 : index
    %c0_133 = arith.constant 0 : index
    %c0_134 = arith.constant 0 : index
    %c0_135 = arith.constant 0 : index
    %116 = vector.load %arg5[%c0_131, %c0_132, %c0_133, %c0_134, %c0_135] : memref<1x1x6x6x16xf32, #tpu.memory_space<vmem>>, vector<1x1x6x6x16xf32>
    %117 = vector.shape_cast %116 : vector<1x1x6x6x16xf32> to vector<6x6x16xf32>
    %c2_136 = arith.constant 2 : index
    %c1_137 = arith.constant 1 : index
    %c1_138 = arith.constant 1 : index
    %c0_139 = arith.constant 0 : index
    %118 = vector.load %arg9[%c2_136, %c1_137, %c1_138, %c0_139] : memref<3x8x8x16xf32, #tpu.memory_space<vmem>>, vector<1x6x6x16xf32>
    %119 = vector.shape_cast %118 : vector<1x6x6x16xf32> to vector<6x6x16xf32>
    %120 = vector.shape_cast %117 : vector<6x6x16xf32> to vector<1x6x6x16xf32>
    tpu.vector_store %arg9[%c2_136, %c1_137, %c1_138, %c0_139], %120 {strides = array<i32>} : memref<3x8x8x16xf32, #tpu.memory_space<vmem>>, vector<1x6x6x16xf32>,
    %121 = vector.shape_cast %1 : vector<16xf32> to vector<1x1x16xf32>
    %122 = vector.broadcast %121 : vector<1x1x16xf32> to vector<6x6x16xf32>
    %c0_140 = arith.constant 0 : index
    %c0_141 = arith.constant 0 : index
    %c0_142 = arith.constant 0 : index
    %c0_143 = arith.constant 0 : index
    %123 = vector.load %arg9[%c0_140, %c0_141, %c0_142, %c0_143] : memref<3x8x8x16xf32, #tpu.memory_space<vmem>>, vector<1x8x6x16xf32>
    %124 = vector.shape_cast %123 : vector<1x8x6x16xf32> to vector<8x6x16xf32>
    %125 = vector.extract_strided_slice %124 {offsets = [0, 0, 0], sizes = [6, 6, 16], strides = [1, 1, 1]} : vector<8x6x16xf32> to vector<6x6x16xf32>
    %126 = vector.shape_cast %11 : vector<16xf32> to vector<1x1x16xf32>
    %127 = vector.broadcast %126 : vector<1x1x16xf32> to vector<6x6x16xf32>
    %128 = arith.mulf %125, %127 : vector<6x6x16xf32>
    %129 = arith.addf %122, %128 : vector<6x6x16xf32>
    %130 = vector.extract_strided_slice %124 {offsets = [1, 0, 0], sizes = [6, 6, 16], strides = [1, 1, 1]} : vector<8x6x16xf32> to vector<6x6x16xf32>
    %131 = vector.shape_cast %23 : vector<16xf32> to vector<1x1x16xf32>
    %132 = vector.broadcast %131 : vector<1x1x16xf32> to vector<6x6x16xf32>
    %133 = arith.mulf %130, %132 : vector<6x6x16xf32>
    %134 = arith.addf %129, %133 : vector<6x6x16xf32>
    %135 = vector.extract_strided_slice %124 {offsets = [2, 0, 0], sizes = [6, 6, 16], strides = [1, 1, 1]} : vector<8x6x16xf32> to vector<6x6x16xf32>
    %136 = vector.shape_cast %35 : vector<16xf32> to vector<1x1x16xf32>
    %137 = vector.broadcast %136 : vector<1x1x16xf32> to vector<6x6x16xf32>
    %138 = arith.mulf %135, %137 : vector<6x6x16xf32>
    %139 = arith.addf %134, %138 : vector<6x6x16xf32>
    %c0_144 = arith.constant 0 : index
    %c0_145 = arith.constant 0 : index
    %c1_146 = arith.constant 1 : index
    %c0_147 = arith.constant 0 : index
    %140 = vector.load %arg9[%c0_144, %c0_145, %c1_146, %c0_147] : memref<3x8x8x16xf32, #tpu.memory_space<vmem>>, vector<1x8x6x16xf32>
    %141 = vector.shape_cast %140 : vector<1x8x6x16xf32> to vector<8x6x16xf32>
    %142 = vector.extract_strided_slice %141 {offsets = [0, 0, 0], sizes = [6, 6, 16], strides = [1, 1, 1]} : vector<8x6x16xf32> to vector<6x6x16xf32>
    %143 = vector.shape_cast %15 : vector<16xf32> to vector<1x1x16xf32>
    %144 = vector.broadcast %143 : vector<1x1x16xf32> to vector<6x6x16xf32>
    %145 = arith.mulf %142, %144 : vector<6x6x16xf32>
    %146 = arith.addf %139, %145 : vector<6x6x16xf32>
    %147 = vector.extract_strided_slice %141 {offsets = [1, 0, 0], sizes = [6, 6, 16], strides = [1, 1, 1]} : vector<8x6x16xf32> to vector<6x6x16xf32>
    %148 = vector.shape_cast %27 : vector<16xf32> to vector<1x1x16xf32>
    %149 = vector.broadcast %148 : vector<1x1x16xf32> to vector<6x6x16xf32>
    %150 = arith.mulf %147, %149 : vector<6x6x16xf32>
    %151 = arith.addf %146, %150 : vector<6x6x16xf32>
    %152 = vector.extract_strided_slice %141 {offsets = [2, 0, 0], sizes = [6, 6, 16], strides = [1, 1, 1]} : vector<8x6x16xf32> to vector<6x6x16xf32>
    %153 = vector.shape_cast %39 : vector<16xf32> to vector<1x1x16xf32>
    %154 = vector.broadcast %153 : vector<1x1x16xf32> to vector<6x6x16xf32>
    %155 = arith.mulf %152, %154 : vector<6x6x16xf32>
    %156 = arith.addf %151, %155 : vector<6x6x16xf32>
    %c0_148 = arith.constant 0 : index
    %c0_149 = arith.constant 0 : index
    %c2_150 = arith.constant 2 : index
    %c0_151 = arith.constant 0 : index
    %157 = vector.load %arg9[%c0_148, %c0_149, %c2_150, %c0_151] : memref<3x8x8x16xf32, #tpu.memory_space<vmem>>, vector<1x8x6x16xf32>
    %158 = vector.shape_cast %157 : vector<1x8x6x16xf32> to vector<8x6x16xf32>
    %159 = vector.extract_strided_slice %158 {offsets = [0, 0, 0], sizes = [6, 6, 16], strides = [1, 1, 1]} : vector<8x6x16xf32> to vector<6x6x16xf32>
    %160 = vector.shape_cast %19 : vector<16xf32> to vector<1x1x16xf32>
    %161 = vector.broadcast %160 : vector<1x1x16xf32> to vector<6x6x16xf32>
    %162 = arith.mulf %159, %161 : vector<6x6x16xf32>
    %163 = arith.addf %156, %162 : vector<6x6x16xf32>
    %164 = vector.extract_strided_slice %158 {offsets = [1, 0, 0], sizes = [6, 6, 16], strides = [1, 1, 1]} : vector<8x6x16xf32> to vector<6x6x16xf32>
    %165 = vector.shape_cast %31 : vector<16xf32> to vector<1x1x16xf32>
    %166 = vector.broadcast %165 : vector<1x1x16xf32> to vector<6x6x16xf32>
    %167 = arith.mulf %164, %166 : vector<6x6x16xf32>
    %168 = arith.addf %163, %167 : vector<6x6x16xf32>
    %169 = vector.extract_strided_slice %158 {offsets = [2, 0, 0], sizes = [6, 6, 16], strides = [1, 1, 1]} : vector<8x6x16xf32> to vector<6x6x16xf32>
    %170 = vector.shape_cast %43 : vector<16xf32> to vector<1x1x16xf32>
    %171 = vector.broadcast %170 : vector<1x1x16xf32> to vector<6x6x16xf32>
    %172 = arith.mulf %169, %171 : vector<6x6x16xf32>
    %173 = arith.addf %168, %172 : vector<6x6x16xf32>
    %c1_152 = arith.constant 1 : index
    %c0_153 = arith.constant 0 : index
    %c0_154 = arith.constant 0 : index
    %c0_155 = arith.constant 0 : index
    %174 = vector.load %arg9[%c1_152, %c0_153, %c0_154, %c0_155] : memref<3x8x8x16xf32, #tpu.memory_space<vmem>>, vector<1x8x6x16xf32>
    %175 = vector.shape_cast %174 : vector<1x8x6x16xf32> to vector<8x6x16xf32>
    %176 = vector.extract_strided_slice %175 {offsets = [0, 0, 0], sizes = [6, 6, 16], strides = [1, 1, 1]} : vector<8x6x16xf32> to vector<6x6x16xf32>
    %177 = vector.shape_cast %45 : vector<16xf32> to vector<1x1x16xf32>
    %178 = vector.broadcast %177 : vector<1x1x16xf32> to vector<6x6x16xf32>
    %179 = arith.mulf %176, %178 : vector<6x6x16xf32>
    %180 = arith.addf %173, %179 : vector<6x6x16xf32>
    %181 = vector.extract_strided_slice %175 {offsets = [1, 0, 0], sizes = [6, 6, 16], strides = [1, 1, 1]} : vector<8x6x16xf32> to vector<6x6x16xf32>
    %182 = vector.shape_cast %51 : vector<16xf32> to vector<1x1x16xf32>
    %183 = vector.broadcast %182 : vector<1x1x16xf32> to vector<6x6x16xf32>
    %184 = arith.mulf %181, %183 : vector<6x6x16xf32>
    %185 = arith.addf %180, %184 : vector<6x6x16xf32>
    %186 = vector.extract_strided_slice %175 {offsets = [2, 0, 0], sizes = [6, 6, 16], strides = [1, 1, 1]} : vector<8x6x16xf32> to vector<6x6x16xf32>
    %187 = vector.shape_cast %57 : vector<16xf32> to vector<1x1x16xf32>
    %188 = vector.broadcast %187 : vector<1x1x16xf32> to vector<6x6x16xf32>
    %189 = arith.mulf %186, %188 : vector<6x6x16xf32>
    %190 = arith.addf %185, %189 : vector<6x6x16xf32>
    %c1_156 = arith.constant 1 : index
    %c0_157 = arith.constant 0 : index
    %c1_158 = arith.constant 1 : index
    %c0_159 = arith.constant 0 : index
    %191 = vector.load %arg9[%c1_156, %c0_157, %c1_158, %c0_159] : memref<3x8x8x16xf32, #tpu.memory_space<vmem>>, vector<1x8x6x16xf32>
    %192 = vector.shape_cast %191 : vector<1x8x6x16xf32> to vector<8x6x16xf32>
    %193 = vector.extract_strided_slice %192 {offsets = [0, 0, 0], sizes = [6, 6, 16], strides = [1, 1, 1]} : vector<8x6x16xf32> to vector<6x6x16xf32>
    %194 = vector.shape_cast %47 : vector<16xf32> to vector<1x1x16xf32>
    %195 = vector.broadcast %194 : vector<1x1x16xf32> to vector<6x6x16xf32>
    %196 = arith.mulf %193, %195 : vector<6x6x16xf32>
    %197 = arith.addf %190, %196 : vector<6x6x16xf32>
    %198 = vector.extract_strided_slice %192 {offsets = [1, 0, 0], sizes = [6, 6, 16], strides = [1, 1, 1]} : vector<8x6x16xf32> to vector<6x6x16xf32>
    %199 = vector.shape_cast %53 : vector<16xf32> to vector<1x1x16xf32>
    %200 = vector.broadcast %199 : vector<1x1x16xf32> to vector<6x6x16xf32>
    %201 = arith.mulf %198, %200 : vector<6x6x16xf32>
    %202 = arith.addf %197, %201 : vector<6x6x16xf32>
    %203 = vector.extract_strided_slice %192 {offsets = [2, 0, 0], sizes = [6, 6, 16], strides = [1, 1, 1]} : vector<8x6x16xf32> to vector<6x6x16xf32>
    %204 = vector.shape_cast %59 : vector<16xf32> to vector<1x1x16xf32>
    %205 = vector.broadcast %204 : vector<1x1x16xf32> to vector<6x6x16xf32>
    %206 = arith.mulf %203, %205 : vector<6x6x16xf32>
    %207 = arith.addf %202, %206 : vector<6x6x16xf32>
    %c1_160 = arith.constant 1 : index
    %c0_161 = arith.constant 0 : index
    %c2_162 = arith.constant 2 : index
    %c0_163 = arith.constant 0 : index
    %208 = vector.load %arg9[%c1_160, %c0_161, %c2_162, %c0_163] : memref<3x8x8x16xf32, #tpu.memory_space<vmem>>, vector<1x8x6x16xf32>
    %209 = vector.shape_cast %208 : vector<1x8x6x16xf32> to vector<8x6x16xf32>
    %210 = vector.extract_strided_slice %209 {offsets = [0, 0, 0], sizes = [6, 6, 16], strides = [1, 1, 1]} : vector<8x6x16xf32> to vector<6x6x16xf32>
    %211 = vector.shape_cast %49 : vector<16xf32> to vector<1x1x16xf32>
    %212 = vector.broadcast %211 : vector<1x1x16xf32> to vector<6x6x16xf32>
    %213 = arith.mulf %210, %212 : vector<6x6x16xf32>
    %214 = arith.addf %207, %213 : vector<6x6x16xf32>
    %215 = vector.extract_strided_slice %209 {offsets = [1, 0, 0], sizes = [6, 6, 16], strides = [1, 1, 1]} : vector<8x6x16xf32> to vector<6x6x16xf32>
    %216 = vector.shape_cast %55 : vector<16xf32> to vector<1x1x16xf32>
    %217 = vector.broadcast %216 : vector<1x1x16xf32> to vector<6x6x16xf32>
    %218 = arith.mulf %215, %217 : vector<6x6x16xf32>
    %219 = arith.addf %214, %218 : vector<6x6x16xf32>
    %220 = vector.extract_strided_slice %209 {offsets = [2, 0, 0], sizes = [6, 6, 16], strides = [1, 1, 1]} : vector<8x6x16xf32> to vector<6x6x16xf32>
    %221 = vector.shape_cast %61 : vector<16xf32> to vector<1x1x16xf32>
    %222 = vector.broadcast %221 : vector<1x1x16xf32> to vector<6x6x16xf32>
    %223 = arith.mulf %220, %222 : vector<6x6x16xf32>
    %224 = arith.addf %219, %223 : vector<6x6x16xf32>
    %c2_164 = arith.constant 2 : index
    %c0_165 = arith.constant 0 : index
    %c0_166 = arith.constant 0 : index
    %c0_167 = arith.constant 0 : index
    %225 = vector.load %arg9[%c2_164, %c0_165, %c0_166, %c0_167] : memref<3x8x8x16xf32, #tpu.memory_space<vmem>>, vector<1x8x6x16xf32>
    %226 = vector.shape_cast %225 : vector<1x8x6x16xf32> to vector<8x6x16xf32>
    %227 = vector.extract_strided_slice %226 {offsets = [0, 0, 0], sizes = [6, 6, 16], strides = [1, 1, 1]} : vector<8x6x16xf32> to vector<6x6x16xf32>
    %228 = vector.shape_cast %71 : vector<16xf32> to vector<1x1x16xf32>
    %229 = vector.broadcast %228 : vector<1x1x16xf32> to vector<6x6x16xf32>
    %230 = arith.mulf %227, %229 : vector<6x6x16xf32>
    %231 = arith.addf %224, %230 : vector<6x6x16xf32>
    %232 = vector.extract_strided_slice %226 {offsets = [1, 0, 0], sizes = [6, 6, 16], strides = [1, 1, 1]} : vector<8x6x16xf32> to vector<6x6x16xf32>
    %233 = vector.shape_cast %83 : vector<16xf32> to vector<1x1x16xf32>
    %234 = vector.broadcast %233 : vector<1x1x16xf32> to vector<6x6x16xf32>
    %235 = arith.mulf %232, %234 : vector<6x6x16xf32>
    %236 = arith.addf %231, %235 : vector<6x6x16xf32>
    %237 = vector.extract_strided_slice %226 {offsets = [2, 0, 0], sizes = [6, 6, 16], strides = [1, 1, 1]} : vector<8x6x16xf32> to vector<6x6x16xf32>
    %238 = vector.shape_cast %95 : vector<16xf32> to vector<1x1x16xf32>
    %239 = vector.broadcast %238 : vector<1x1x16xf32> to vector<6x6x16xf32>
    %240 = arith.mulf %237, %239 : vector<6x6x16xf32>
    %241 = arith.addf %236, %240 : vector<6x6x16xf32>
    %c2_168 = arith.constant 2 : index
    %c0_169 = arith.constant 0 : index
    %c1_170 = arith.constant 1 : index
    %c0_171 = arith.constant 0 : index
    %242 = vector.load %arg9[%c2_168, %c0_169, %c1_170, %c0_171] : memref<3x8x8x16xf32, #tpu.memory_space<vmem>>, vector<1x8x6x16xf32>
    %243 = vector.shape_cast %242 : vector<1x8x6x16xf32> to vector<8x6x16xf32>
    %244 = vector.extract_strided_slice %243 {offsets = [0, 0, 0], sizes = [6, 6, 16], strides = [1, 1, 1]} : vector<8x6x16xf32> to vector<6x6x16xf32>
    %245 = vector.shape_cast %75 : vector<16xf32> to vector<1x1x16xf32>
    %246 = vector.broadcast %245 : vector<1x1x16xf32> to vector<6x6x16xf32>
    %247 = arith.mulf %244, %246 : vector<6x6x16xf32>
    %248 = arith.addf %241, %247 : vector<6x6x16xf32>
    %249 = vector.extract_strided_slice %243 {offsets = [1, 0, 0], sizes = [6, 6, 16], strides = [1, 1, 1]} : vector<8x6x16xf32> to vector<6x6x16xf32>
    %250 = vector.shape_cast %87 : vector<16xf32> to vector<1x1x16xf32>
    %251 = vector.broadcast %250 : vector<1x1x16xf32> to vector<6x6x16xf32>
    %252 = arith.mulf %249, %251 : vector<6x6x16xf32>
    %253 = arith.addf %248, %252 : vector<6x6x16xf32>
    %254 = vector.extract_strided_slice %243 {offsets = [2, 0, 0], sizes = [6, 6, 16], strides = [1, 1, 1]} : vector<8x6x16xf32> to vector<6x6x16xf32>
    %255 = vector.shape_cast %99 : vector<16xf32> to vector<1x1x16xf32>
    %256 = vector.broadcast %255 : vector<1x1x16xf32> to vector<6x6x16xf32>
    %257 = arith.mulf %254, %256 : vector<6x6x16xf32>
    %258 = arith.addf %253, %257 : vector<6x6x16xf32>
    %c2_172 = arith.constant 2 : index
    %c0_173 = arith.constant 0 : index
    %c2_174 = arith.constant 2 : index
    %c0_175 = arith.constant 0 : index
    %259 = vector.load %arg9[%c2_172, %c0_173, %c2_174, %c0_175] : memref<3x8x8x16xf32, #tpu.memory_space<vmem>>, vector<1x8x6x16xf32>
    %260 = vector.shape_cast %259 : vector<1x8x6x16xf32> to vector<8x6x16xf32>
    %261 = vector.extract_strided_slice %260 {offsets = [0, 0, 0], sizes = [6, 6, 16], strides = [1, 1, 1]} : vector<8x6x16xf32> to vector<6x6x16xf32>
    %262 = vector.shape_cast %79 : vector<16xf32> to vector<1x1x16xf32>
    %263 = vector.broadcast %262 : vector<1x1x16xf32> to vector<6x6x16xf32>
    %264 = arith.mulf %261, %263 : vector<6x6x16xf32>
    %265 = arith.addf %258, %264 : vector<6x6x16xf32>
    %266 = vector.extract_strided_slice %260 {offsets = [1, 0, 0], sizes = [6, 6, 16], strides = [1, 1, 1]} : vector<8x6x16xf32> to vector<6x6x16xf32>
    %267 = vector.shape_cast %91 : vector<16xf32> to vector<1x1x16xf32>
    %268 = vector.broadcast %267 : vector<1x1x16xf32> to vector<6x6x16xf32>
    %269 = arith.mulf %266, %268 : vector<6x6x16xf32>
    %270 = arith.addf %265, %269 : vector<6x6x16xf32>
    %271 = vector.extract_strided_slice %260 {offsets = [2, 0, 0], sizes = [6, 6, 16], strides = [1, 1, 1]} : vector<8x6x16xf32> to vector<6x6x16xf32>
    %272 = vector.shape_cast %103 : vector<16xf32> to vector<1x1x16xf32>
    %273 = vector.broadcast %272 : vector<1x1x16xf32> to vector<6x6x16xf32>
    %274 = arith.mulf %271, %273 : vector<6x6x16xf32>
    %275 = arith.addf %270, %274 : vector<6x6x16xf32>
    %c0_176 = arith.constant 0 : index
    %c0_177 = arith.constant 0 : index
    %c0_178 = arith.constant 0 : index
    %c0_179 = arith.constant 0 : index
    %c0_180 = arith.constant 0 : index
    %276 = vector.load %arg8[%c0_176, %c0_177, %c0_178, %c0_179, %c0_180] : memref<1x1x6x6x16xf32, #tpu.memory_space<vmem>>, vector<1x1x6x6x16xf32>
    %277 = vector.shape_cast %276 : vector<1x1x6x6x16xf32> to vector<6x6x16xf32>
    %278 = vector.shape_cast %275 : vector<6x6x16xf32> to vector<1x1x6x6x16xf32>
    tpu.vector_store %arg8[%c0_176, %c0_177, %c0_178, %c0_179, %c0_180], %278 {strides = array<i32>} : memref<1x1x6x6x16xf32, #tpu.memory_space<vmem>>, vector<1x1x6x6x16xf32>,
    return
  }
  func.func @transform_0(%arg0: i32, %arg1: i32, %arg2: i32) -> (i32, i32, i32, i32, i32) {
    %c-1_i32 = arith.constant -1 : i32
    %0 = arith.addi %arg1, %c-1_i32 : i32
    %c0_i32 = arith.constant 0 : i32
    %c3_i32 = arith.constant 3 : i32
    %1 = arith.maxsi %c0_i32, %0 : i32
    %2 = arith.minsi %c3_i32, %1 : i32
    %c0_i32_0 = arith.constant 0 : i32
    %c0_i32_1 = arith.constant 0 : i32
    %c0_i32_2 = arith.constant 0 : i32
    return %arg0, %2, %c0_i32_0, %c0_i32_1, %arg2 : i32, i32, i32, i32, i32
  }
  func.func @transform_1(%arg0: i32, %arg1: i32, %arg2: i32) -> (i32, i32, i32, i32, i32) {
    %c0_i32 = arith.constant 0 : i32
    %0 = arith.addi %arg1, %c0_i32 : i32
    %c0_i32_0 = arith.constant 0 : i32
    %c3_i32 = arith.constant 3 : i32
    %1 = arith.maxsi %c0_i32_0, %0 : i32
    %2 = arith.minsi %c3_i32, %1 : i32
    %c0_i32_1 = arith.constant 0 : i32
    %c0_i32_2 = arith.constant 0 : i32
    %c0_i32_3 = arith.constant 0 : i32
    return %arg0, %2, %c0_i32_1, %c0_i32_2, %arg2 : i32, i32, i32, i32, i32
  }
  func.func @transform_2(%arg0: i32, %arg1: i32, %arg2: i32) -> (i32, i32, i32, i32, i32) {
    %c1_i32 = arith.constant 1 : i32
    %0 = arith.addi %arg1, %c1_i32 : i32
    %c0_i32 = arith.constant 0 : i32
    %c3_i32 = arith.constant 3 : i32
    %1 = arith.maxsi %c0_i32, %0 : i32
    %2 = arith.minsi %c3_i32, %1 : i32
    %c0_i32_0 = arith.constant 0 : i32
    %c0_i32_1 = arith.constant 0 : i32
    %c0_i32_2 = arith.constant 0 : i32
    return %arg0, %2, %c0_i32_0, %c0_i32_1, %arg2 : i32, i32, i32, i32, i32
  }
  func.func @transform_3(%arg0: i32, %arg1: i32, %arg2: i32) -> (i32, i32, i32, i32) {
    %c0_i32 = arith.constant 0 : i32
    %c0_i32_0 = arith.constant 0 : i32
    %c0_i32_1 = arith.constant 0 : i32
    %c0_i32_2 = arith.constant 0 : i32
    return %c0_i32, %c0_i32_0, %c0_i32_1, %arg2 : i32, i32, i32, i32
  }
  func.func @transform_4(%arg0: i32, %arg1: i32, %arg2: i32) -> (i32, i32) {
    %c0_i32 = arith.constant 0 : i32
    %c0_i32_0 = arith.constant 0 : i32
    return %c0_i32, %arg2 : i32, i32
  }
  func.func @transform_5(%arg0: i32, %arg1: i32, %arg2: i32) -> (i32, i32, i32, i32, i32) {
    %c0_i32 = arith.constant 0 : i32
    %c0_i32_0 = arith.constant 0 : i32
    %c0_i32_1 = arith.constant 0 : i32
    return %arg0, %arg1, %c0_i32, %c0_i32_0, %arg2 : i32, i32, i32, i32, i32
  }
}

</mosaic_0001>

<llo_original>
// kernel: tpu_custom_call.1
$region0: #{tpu_custom_call.1}
  #allocation0 [shape = 'u32[]', space=smem, size = 0x4, offset = 0x4, fixed_abs, tag = 'smem constant byte address 0x4 - core index']
  #allocation1 [shape = 'u32[144,128]{1,0:T(1,128)}', space=vmem, size = 0x12000, scoped, tag = 'internal scratch']
  #allocation2 [shape = 'f32[3,8,8,16]{3,2,1,0:T(8,128)}', space=vmem, size = 0x18000, scoped, tag = 'scratch operand']
  %s0 = inlined_call_operand.vmem [shape: f32[2,4,6,6,16], index: 0, kind: input, shape index: {}]
  %s1 = inlined_call_operand.vmem [shape: f32[2,4,6,6,16], index: 1, kind: input, shape index: {}]
  %s2 = inlined_call_operand.vmem [shape: f32[2,4,6,6,16], index: 2, kind: input, shape index: {}]
  %s3 = inlined_call_operand.vmem [shape: f32[3,3,3,16], index: 3, kind: input, shape index: {}]
  %s4 = inlined_call_operand.vmem [shape: f32[1,16], index: 4, kind: input, shape index: {}]
  %s5 = inlined_call_operand.vmem [shape: f32[2,4,6,6,16], index: 5, kind: output, shape index: {}]
  %s6 = sld [smem:[#allocation0]]
  $region53: #{tpu_custom_call.1} parent=0
    _
  %s8 = ssub.s32 1, %s6
  %s9 = scalar_select 0, %s8, %s6
  loop: start=0, step=1, limit=10
  $region2: #{tpu_custom_call.1} parent=0 // loop_pre_header
    _
  $region3: #{tpu_custom_call.1} parent=0 // loop_header
    %s11 = sphi 0, %s15
    %p12 = scmp.ge.s32.totalorder %s11, 10
    %s18 = sphi 0, %s37
    %s19 = sphi 0, %s33
    %s20 = sphi 0, %s29
    %s21 = sphi 0, %s18
    %s22 = sphi 0, %s19
    %s23 = sphi 0, %s20
    %s24 = sphi 0, %s21
    %s25 = sphi 0, %s22
    %s26 = sphi 0, %s23
    %s54 = sphi 0, %s56
    %s57 = sphi 0, %s54
    %s58 = sphi 0, %s57
    %s74 = sphi 0, %s58
    %s92 = sphi 0, %s94
    %s95 = sphi 0, %s92
    %s96 = sphi 0, %s95
    %s112 = sphi 0, %s96
    %s132 = sphi 0, %s134
    %s135 = sphi 0, %s132
    %s136 = sphi 0, %s135
    %s152 = sphi 0, %s136
    %s158 = sphi 0, %s160
    %s161 = sphi 0, %s158
    %s162 = sphi 0, %s161
    %s178 = sphi 0, %s162
    %s184 = sphi 0, %s186
    %s187 = sphi 0, %s184
    %s188 = sphi 0, %s187
    %s204 = sphi 0, %s188
    %s214 = sphi 0, %s216
    %s217 = sphi 0, %s214
    %s218 = sphi 0, %s217
    %s234 = sphi 0, %s218
  $region4: #{tpu_custom_call.1} parent=0 // loop_header_branch
    %14 = sbr.rel (%p12) target = $region8
  $region5: #{tpu_custom_call.1} parent=0 // loop_body
    %s16 = ssub.s32 %s11, 1
    %s17 = ssub.s32 %s11, 2
    %s27 = sadd.s32 1, %s20
    %p28 = scmp.ge.s32.totalorder %s27, 1
    %s29 = scalar_select %p28, 0, %s27
    %s30 = sadd.s32 1, %s19
    %s31 = scalar_select %p28, %s30, %s19
    %p32 = scmp.ge.s32.totalorder %s31, 4
    %s33 = scalar_select %p32, 0, %s31
    %s34 = sadd.s32 1, %s18
    %s35 = scalar_select %p32, %s34, %s18
    %p36 = scmp.ge.s32.totalorder %s35, 2
    %s37 = scalar_select %p36, 0, %s35
    %s38 = sadd.s32 %s19, 4294967295
    %p39 = scmp.gt.s32.totalorder %s38, 0
    %s40 = scalar_select %p39, %s38, 0
    %p41 = scmp.lt.s32.totalorder %s40, 3
    %s42 = scalar_select %p41, %s40, 3
    %s43 = sadd.s32 %s33, 4294967295
    %p44 = scmp.gt.s32.totalorder %s43, 0
    %s45 = scalar_select %p44, %s43, 0
    %p46 = scmp.lt.s32.totalorder %s45, 3
    %s47 = scalar_select %p46, %s45, 3
    %s48 = ssub.s32 %s18, %s37
    %s49 = ssub.s32 %s42, %s47
    %s50 = sor.u32 %s48, %s49
    %s51 = ssub.s32 %s20, %s29
    %s52 = sor.u32 %s50, %s51
    %p53 = scmp.eq.s32.totalorder %s52, 0
    %s55 = sadd.s32 %s54, 1
    %s56 = scalar_select %p53, %s54, %s55
    %p59 = pneg %p53
    %p60 = scmp.eq.s32.totalorder %s11, 7
    %p61 = por %p59, %p60
    %p62 = scmp.ne.s32.totalorder %s54, %s57
    %p63 = scmp.eq.s32.totalorder %s11, 0
    %p64 = por %p62, %p63
    %p65 = scmp.ne.s32.totalorder %s54, %s57
    %p66 = scmp.eq.s32.totalorder %s16, 7
    %p67 = por %p65, %p66
    %p68 = scmp.ne.s32.totalorder %s57, %s58
    %p69 = scmp.eq.s32.totalorder %s16, 0
    %p70 = por %p68, %p69
    %p71 = scmp.ne.s32.totalorder %s57, %s58
    %p72 = scmp.eq.s32.totalorder %s17, 7
    %p73 = por %p71, %p72
    %p75 = scmp.ne.s32.totalorder %s58, %s74
    %p76 = scmp.eq.s32.totalorder %s17, 0
    %p77 = por %p75, %p76
    %p78 = scmp.gt.s32.totalorder %s19, 0
    %s79 = scalar_select %p78, %s19, 0
    %p80 = scmp.lt.s32.totalorder %s79, 3
    %s81 = scalar_select %p80, %s79, 3
    %p82 = scmp.gt.s32.totalorder %s33, 0
    %s83 = scalar_select %p82, %s33, 0
    %p84 = scmp.lt.s32.totalorder %s83, 3
    %s85 = scalar_select %p84, %s83, 3
    %s86 = ssub.s32 %s18, %s37
    %s87 = ssub.s32 %s81, %s85
    %s88 = sor.u32 %s86, %s87
    %s89 = ssub.s32 %s20, %s29
    %s90 = sor.u32 %s88, %s89
    %p91 = scmp.eq.s32.totalorder %s90, 0
    %s93 = sadd.s32 %s92, 1
    %s94 = scalar_select %p91, %s92, %s93
    %p97 = pneg %p91
    %p98 = scmp.eq.s32.totalorder %s11, 7
    %p99 = por %p97, %p98
    %p100 = scmp.ne.s32.totalorder %s92, %s95
    %p101 = scmp.eq.s32.totalorder %s11, 0
    %p102 = por %p100, %p101
    %p103 = scmp.ne.s32.totalorder %s92, %s95
    %p104 = scmp.eq.s32.totalorder %s16, 7
    %p105 = por %p103, %p104
    %p106 = scmp.ne.s32.totalorder %s95, %s96
    %p107 = scmp.eq.s32.totalorder %s16, 0
    %p108 = por %p106, %p107
    %p109 = scmp.ne.s32.totalorder %s95, %s96
    %p110 = scmp.eq.s32.totalorder %s17, 7
    %p111 = por %p109, %p110
    %p113 = scmp.ne.s32.totalorder %s96, %s112
    %p114 = scmp.eq.s32.totalorder %s17, 0
    %p115 = por %p113, %p114
    %s116 = sadd.s32 %s19, 1
    %p117 = scmp.gt.s32.totalorder %s116, 0
    %s118 = scalar_select %p117, %s116, 0
    %p119 = scmp.lt.s32.totalorder %s118, 3
    %s120 = scalar_select %p119, %s118, 3
    %s121 = sadd.s32 %s33, 1
    %p122 = scmp.gt.s32.totalorder %s121, 0
    %s123 = scalar_select %p122, %s121, 0
    %p124 = scmp.lt.s32.totalorder %s123, 3
    %s125 = scalar_select %p124, %s123, 3
    %s126 = ssub.s32 %s18, %s37
    %s127 = ssub.s32 %s120, %s125
    %s128 = sor.u32 %s126, %s127
    %s129 = ssub.s32 %s20, %s29
    %s130 = sor.u32 %s128, %s129
    %p131 = scmp.eq.s32.totalorder %s130, 0
    %s133 = sadd.s32 %s132, 1
    %s134 = scalar_select %p131, %s132, %s133
    %p137 = pneg %p131
    %p138 = scmp.eq.s32.totalorder %s11, 7
    %p139 = por %p137, %p138
    %p140 = scmp.ne.s32.totalorder %s132, %s135
    %p141 = scmp.eq.s32.totalorder %s11, 0
    %p142 = por %p140, %p141
    %p143 = scmp.ne.s32.totalorder %s132, %s135
    %p144 = scmp.eq.s32.totalorder %s16, 7
    %p145 = por %p143, %p144
    %p146 = scmp.ne.s32.totalorder %s135, %s136
    %p147 = scmp.eq.s32.totalorder %s16, 0
    %p148 = por %p146, %p147
    %p149 = scmp.ne.s32.totalorder %s135, %s136
    %p150 = scmp.eq.s32.totalorder %s17, 7
    %p151 = por %p149, %p150
    %p153 = scmp.ne.s32.totalorder %s136, %s152
    %p154 = scmp.eq.s32.totalorder %s17, 0
    %p155 = por %p153, %p154
    %s156 = ssub.s32 %s20, %s29
    %p157 = scmp.eq.s32.totalorder %s156, 0
    %s159 = sadd.s32 %s158, 1
    %s160 = scalar_select %p157, %s158, %s159
    %p163 = pneg %p157
    %p164 = scmp.eq.s32.totalorder %s11, 7
    %p165 = por %p163, %p164
    %p166 = scmp.ne.s32.totalorder %s158, %s161
    %p167 = scmp.eq.s32.totalorder %s11, 0
    %p168 = por %p166, %p167
    %p169 = scmp.ne.s32.totalorder %s158, %s161
    %p170 = scmp.eq.s32.totalorder %s16, 7
    %p171 = por %p169, %p170
    %p172 = scmp.ne.s32.totalorder %s161, %s162
    %p173 = scmp.eq.s32.totalorder %s16, 0
    %p174 = por %p172, %p173
    %p175 = scmp.ne.s32.totalorder %s161, %s162
    %p176 = scmp.eq.s32.totalorder %s17, 7
    %p177 = por %p175, %p176
    %p179 = scmp.ne.s32.totalorder %s162, %s178
    %p180 = scmp.eq.s32.totalorder %s17, 0
    %p181 = por %p179, %p180
    %s182 = ssub.s32 %s20, %s29
    %p183 = scmp.eq.s32.totalorder %s182, 0
    %s185 = sadd.s32 %s184, 1
    %s186 = scalar_select %p183, %s184, %s185
    %p189 = pneg %p183
    %p190 = scmp.eq.s32.totalorder %s11, 7
    %p191 = por %p189, %p190
    %p192 = scmp.ne.s32.totalorder %s184, %s187
    %p193 = scmp.eq.s32.totalorder %s11, 0
    %p194 = por %p192, %p193
    %p195 = scmp.ne.s32.totalorder %s184, %s187
    %p196 = scmp.eq.s32.totalorder %s16, 7
    %p197 = por %p195, %p196
    %p198 = scmp.ne.s32.totalorder %s187, %s188
    %p199 = scmp.eq.s32.totalorder %s16, 0
    %p200 = por %p198, %p199
    %p201 = scmp.ne.s32.totalorder %s187, %s188
    %p202 = scmp.eq.s32.totalorder %s17, 7
    %p203 = por %p201, %p202
    %p205 = scmp.ne.s32.totalorder %s188, %s204
    %p206 = scmp.eq.s32.totalorder %s17, 0
    %p207 = por %p205, %p206
    %s208 = ssub.s32 %s18, %s37
    %s209 = ssub.s32 %s19, %s33
    %s210 = sor.u32 %s208, %s209
    %s211 = ssub.s32 %s20, %s29
    %s212 = sor.u32 %s210, %s211
    %p213 = scmp.eq.s32.totalorder %s212, 0
    %s215 = sadd.s32 %s214, 1
    %s216 = scalar_select %p213, %s214, %s215
    %p219 = pneg %p213
    %p220 = scmp.eq.s32.totalorder %s11, 7
    %p221 = por %p219, %p220
    %p222 = scmp.ne.s32.totalorder %s214, %s217
    %p223 = scmp.eq.s32.totalorder %s11, 0
    %p224 = por %p222, %p223
    %p225 = scmp.ne.s32.totalorder %s214, %s217
    %p226 = scmp.eq.s32.totalorder %s16, 7
    %p227 = por %p225, %p226
    %p228 = scmp.ne.s32.totalorder %s217, %s218
    %p229 = scmp.eq.s32.totalorder %s16, 0
    %p230 = por %p228, %p229
    %p231 = scmp.ne.s32.totalorder %s217, %s218
    %p232 = scmp.eq.s32.totalorder %s17, 7
    %p233 = por %p231, %p232
    %p235 = scmp.ne.s32.totalorder %s218, %s234
    %p236 = scmp.eq.s32.totalorder %s17, 0
    %p237 = por %p235, %p236
    %p238 = scmp.le.s32.totalorder 1, %s11
    %p239 = scmp.lt.s32.totalorder %s11, 9
    %p240 = pnand %p238, %p239
    %p241 = pneg %p240
    // Predicated region
    $region9: #{tpu_custom_call.1} parent=5 // pred_check
      _
    $region10: #{tpu_custom_call.1} parent=5 // pred_check_branch
      %243 = sbr.rel (%p240) target = $region12
    $region11: #{tpu_custom_call.1} parent=5 // pred_region
      %s244 = ssub.s32 %s11, 1
      // Predicated region
      $region13: #{tpu_custom_call.1} parent=11 // pred_check
        %p245 = pneg %p174
      $region14: #{tpu_custom_call.1} parent=11 // pred_check_branch
        %247 = sbr.rel (%p245) target = $region16
      $region15: #{tpu_custom_call.1} parent=11 // pred_region
        %p248 = scmp.lt.s32.totalorder %s23, 0
        %s249 = scalar_select %p248, %s23, 0
        %s250 = smul.addr %s249, 4
        %s251 = scalar_lea.vmem %s3, %s250
      $region16: #{tpu_custom_call.1} parent=11 // pred_fallthru
        _
      // Predicated region
      $region17: #{tpu_custom_call.1} parent=11 // pred_check
        %p252 = pneg %p200
      $region18: #{tpu_custom_call.1} parent=11 // pred_check_branch
        %254 = sbr.rel (%p252) target = $region20
      $region19: #{tpu_custom_call.1} parent=11 // pred_region
        %p255 = scmp.lt.s32.totalorder %s23, 0
        %s256 = scalar_select %p255, %s23, 0
        %s257 = scalar_lea.vmem %s4, %s256
      $region20: #{tpu_custom_call.1} parent=11 // pred_fallthru
        _
    $region12: #{tpu_custom_call.1} parent=5 // pred_fallthru
      _
    %p258 = scmp.lt.s32.totalorder %s11, 8
    // Predicated region
    $region21: #{tpu_custom_call.1} parent=5 // pred_check
      %p259 = pneg %p258
    $region22: #{tpu_custom_call.1} parent=5 // pred_check_branch
      %261 = sbr.rel (%p259) target = $region24
    $region23: #{tpu_custom_call.1} parent=5 // pred_region
      // Predicated region
      $region25: #{tpu_custom_call.1} parent=23 // pred_check
        %p262 = pneg %p64
      $region26: #{tpu_custom_call.1} parent=23 // pred_check_branch
        %264 = sbr.rel (%p262) target = $region28
      $region27: #{tpu_custom_call.1} parent=23 // pred_region
        %s265 = sadd.s32 %s19, 4294967295
        %p266 = scmp.gt.s32.totalorder %s265, 0
        %s267 = scalar_select %p266, %s265, 0
        %p268 = scmp.lt.s32.totalorder %s267, 3
        %s269 = scalar_select %p268, %s267, 3
        %p270 = scmp.lt.s32.totalorder %s18, 1
        %s271 = scalar_select %p270, %s18, 1
        %p272 = scmp.lt.s32.totalorder %s269, 3
        %s273 = scalar_select %p272, %s269, 3
        %p274 = scmp.lt.s32.totalorder %s20, 0
        %s275 = scalar_select %p274, %s20, 0
        %s276 = smul.addr %s273, 6
        %s277 = sadd.s32 %s275, %s276
        %s278 = smul.addr %s271, 24
        %s279 = sadd.s32 %s277, %s278
        %s280 = smul.addr %s279, 8
        %s281 = scalar_lea.vmem %s0, %s280
        %s282 = sadd.s32 %s19, 4294967295
        %p283 = scmp.gt.s32.totalorder %s282, 0
        %s284 = scalar_select %p283, %s282, 0
        %p285 = scmp.lt.s32.totalorder %s284, 3
        %s286 = scalar_select %p285, %s284, 3
      $region28: #{tpu_custom_call.1} parent=23 // pred_fallthru
        _
      // Predicated region
      $region29: #{tpu_custom_call.1} parent=23 // pred_check
        %p287 = pneg %p102
      $region30: #{tpu_custom_call.1} parent=23 // pred_check_branch
        %289 = sbr.rel (%p287) target = $region32
      $region31: #{tpu_custom_call.1} parent=23 // pred_region
        %p290 = scmp.gt.s32.totalorder %s19, 0
        %s291 = scalar_select %p290, %s19, 0
        %p292 = scmp.lt.s32.totalorder %s291, 3
        %s293 = scalar_select %p292, %s291, 3
        %p294 = scmp.lt.s32.totalorder %s18, 1
        %s295 = scalar_select %p294, %s18, 1
        %p296 = scmp.lt.s32.totalorder %s293, 3
        %s297 = scalar_select %p296, %s293, 3
        %p298 = scmp.lt.s32.totalorder %s20, 0
        %s299 = scalar_select %p298, %s20, 0
        %s300 = smul.addr %s297, 6
        %s301 = sadd.s32 %s299, %s300
        %s302 = smul.addr %s295, 24
        %s303 = sadd.s32 %s301, %s302
        %s304 = smul.addr %s303, 8
        %s305 = scalar_lea.vmem %s1, %s304
        %p306 = scmp.gt.s32.totalorder %s19, 0
        %s307 = scalar_select %p306, %s19, 0
        %p308 = scmp.lt.s32.totalorder %s307, 3
        %s309 = scalar_select %p308, %s307, 3
      $region32: #{tpu_custom_call.1} parent=23 // pred_fallthru
        _
      // Predicated region
      $region33: #{tpu_custom_call.1} parent=23 // pred_check
        %p310 = pneg %p142
      $region34: #{tpu_custom_call.1} parent=23 // pred_check_branch
        %312 = sbr.rel (%p310) target = $region36
      $region35: #{tpu_custom_call.1} parent=23 // pred_region
        %s313 = sadd.s32 %s19, 1
        %p314 = scmp.gt.s32.totalorder %s313, 0
        %s315 = scalar_select %p314, %s313, 0
        %p316 = scmp.lt.s32.totalorder %s315, 3
        %s317 = scalar_select %p316, %s315, 3
        %p318 = scmp.lt.s32.totalorder %s18, 1
        %s319 = scalar_select %p318, %s18, 1
        %p320 = scmp.lt.s32.totalorder %s317, 3
        %s321 = scalar_select %p320, %s317, 3
        %p322 = scmp.lt.s32.totalorder %s20, 0
        %s323 = scalar_select %p322, %s20, 0
        %s324 = smul.addr %s321, 6
        %s325 = sadd.s32 %s323, %s324
        %s326 = smul.addr %s319, 24
        %s327 = sadd.s32 %s325, %s326
        %s328 = smul.addr %s327, 8
        %s329 = scalar_lea.vmem %s2, %s328
        %s330 = sadd.s32 %s19, 1
        %p331 = scmp.gt.s32.totalorder %s330, 0
        %s332 = scalar_select %p331, %s330, 0
        %p333 = scmp.lt.s32.totalorder %s332, 3
        %s334 = scalar_select %p333, %s332, 3
      $region36: #{tpu_custom_call.1} parent=23 // pred_fallthru
        _
    $region24: #{tpu_custom_call.1} parent=5 // pred_fallthru
      _
    %p335 = scmp.le.s32.totalorder 1, %s11
    %p336 = scmp.lt.s32.totalorder %s11, 9
    %p337 = pnand %p335, %p336
    %p338 = pneg %p337
    // Predicated region
    $region37: #{tpu_custom_call.1} parent=5 // pred_check
      _
    $region38: #{tpu_custom_call.1} parent=5 // pred_check_branch
      %340 = sbr.rel (%p337) target = $region40
    $region39: #{tpu_custom_call.1} parent=5 // pred_region
      %s341 = ssub.s32 %s11, 1
      %s342 = sadd.s32 %s22, 4294967295
      %p343 = scmp.gt.s32.totalorder %s342, 0
      %s344 = scalar_select %p343, %s342, 0
      %p345 = scmp.lt.s32.totalorder %s344, 3
      %s346 = scalar_select %p345, %s344, 3
      %p347 = scmp.lt.s32.totalorder %s21, 1
      %s348 = scalar_select %p347, %s21, 1
      %p349 = scmp.lt.s32.totalorder %s346, 3
      %s350 = scalar_select %p349, %s346, 3
      %p351 = scmp.lt.s32.totalorder %s23, 0
      %s352 = scalar_select %p351, %s23, 0
      %s353 = smul.addr %s350, 6
      %s354 = sadd.s32 %s352, %s353
      %s355 = smul.addr %s348, 24
      %s356 = sadd.s32 %s354, %s355
      %s357 = smul.addr %s356, 8
      %s358 = scalar_lea.vmem %s0, %s357
      %p359 = pneg %p70
      %p360 = pneg %p67
      %p361 = scmp.gt.s32.totalorder %s22, 0
      %s362 = scalar_select %p361, %s22, 0
      %p363 = scmp.lt.s32.totalorder %s362, 3
      %s364 = scalar_select %p363, %s362, 3
      %p365 = scmp.lt.s32.totalorder %s21, 1
      %s366 = scalar_select %p365, %s21, 1
      %p367 = scmp.lt.s32.totalorder %s364, 3
      %s368 = scalar_select %p367, %s364, 3
      %p369 = scmp.lt.s32.totalorder %s23, 0
      %s370 = scalar_select %p369, %s23, 0
      %s371 = smul.addr %s368, 6
      %s372 = sadd.s32 %s370, %s371
      %s373 = smul.addr %s366, 24
      %s374 = sadd.s32 %s372, %s373
      %s375 = smul.addr %s374, 8
      %s376 = scalar_lea.vmem %s1, %s375
      %p377 = pneg %p108
      %p378 = pneg %p105
      %s379 = sadd.s32 %s22, 1
      %p380 = scmp.gt.s32.totalorder %s379, 0
      %s381 = scalar_select %p380, %s379, 0
      %p382 = scmp.lt.s32.totalorder %s381, 3
      %s383 = scalar_select %p382, %s381, 3
      %p384 = scmp.lt.s32.totalorder %s21, 1
      %s385 = scalar_select %p384, %s21, 1
      %p386 = scmp.lt.s32.totalorder %s383, 3
      %s387 = scalar_select %p386, %s383, 3
      %p388 = scmp.lt.s32.totalorder %s23, 0
      %s389 = scalar_select %p388, %s23, 0
      %s390 = smul.addr %s387, 6
      %s391 = sadd.s32 %s389, %s390
      %s392 = smul.addr %s385, 24
      %s393 = sadd.s32 %s391, %s392
      %s394 = smul.addr %s393, 8
      %s395 = scalar_lea.vmem %s2, %s394
      %p396 = pneg %p148
      %p397 = pneg %p145
      %p398 = scmp.lt.s32.totalorder %s23, 0
      %s399 = scalar_select %p398, %s23, 0
      %s400 = smul.addr %s399, 4
      %s401 = scalar_lea.vmem %s3, %s400
      %p402 = pneg %p174
      %p403 = pneg %p171
      %p404 = scmp.lt.s32.totalorder %s23, 0
      %s405 = scalar_select %p404, %s23, 0
      %s406 = scalar_lea.vmem %s4, %s405
      %p407 = pneg %p200
      %p408 = pneg %p197
      %p409 = pneg %p230
      %p410 = pneg %p227
      %p411 = scmp.lt.s32.totalorder %s21, 1
      %s412 = scalar_select %p411, %s21, 1
      %p413 = scmp.lt.s32.totalorder %s22, 3
      %s414 = scalar_select %p413, %s22, 3
      %p415 = scmp.lt.s32.totalorder %s23, 0
      %s416 = scalar_select %p415, %s23, 0
      %s417 = smul.addr %s414, 6
      %s418 = sadd.s32 %s416, %s417
      %s419 = smul.addr %s412, 24
      %s420 = sadd.s32 %s418, %s419
      %s421 = smul.addr %s420, 8
      %s422 = scalar_lea.vmem %s5, %s421
      %s423 = sadd.s32 %s22, 4294967295
      %p424 = scmp.gt.s32.totalorder %s423, 0
      %s425 = scalar_select %p424, %s423, 0
      %p426 = scmp.lt.s32.totalorder %s425, 3
      %s427 = scalar_select %p426, %s425, 3
      %p428 = scmp.lt.s32.totalorder %s21, 1
      %s429 = scalar_select %p428, %s21, 1
      %p430 = scmp.lt.s32.totalorder %s427, 3
      %s431 = scalar_select %p430, %s427, 3
      %p432 = scmp.lt.s32.totalorder %s23, 0
      %s433 = scalar_select %p432, %s23, 0
      %s434 = smul.addr %s431, 6
      %s435 = sadd.s32 %s433, %s434
      %s436 = smul.addr %s429, 24
      %s437 = sadd.s32 %s435, %s436
      %s438 = smul.addr %s437, 8
      %s439 = scalar_lea.vmem %s0, %s438
      %s440 = sadd.s32 %s22, 4294967295
      %p441 = scmp.gt.s32.totalorder %s440, 0
      %s442 = scalar_select %p441, %s440, 0
      %p443 = scmp.lt.s32.totalorder %s442, 3
      %s444 = scalar_select %p443, %s442, 3
      %p445 = scmp.gt.s32.totalorder %s22, 0
      %s446 = scalar_select %p445, %s22, 0
      %p447 = scmp.lt.s32.totalorder %s446, 3
      %s448 = scalar_select %p447, %s446, 3
      %p449 = scmp.lt.s32.totalorder %s21, 1
      %s450 = scalar_select %p449, %s21, 1
      %p451 = scmp.lt.s32.totalorder %s448, 3
      %s452 = scalar_select %p451, %s448, 3
      %p453 = scmp.lt.s32.totalorder %s23, 0
      %s454 = scalar_select %p453, %s23, 0
      %s455 = smul.addr %s452, 6
      %s456 = sadd.s32 %s454, %s455
      %s457 = smul.addr %s450, 24
      %s458 = sadd.s32 %s456, %s457
      %s459 = smul.addr %s458, 8
      %s460 = scalar_lea.vmem %s1, %s459
      %p461 = scmp.gt.s32.totalorder %s22, 0
      %s462 = scalar_select %p461, %s22, 0
      %p463 = scmp.lt.s32.totalorder %s462, 3
      %s464 = scalar_select %p463, %s462, 3
      %s465 = sadd.s32 %s22, 1
      %p466 = scmp.gt.s32.totalorder %s465, 0
      %s467 = scalar_select %p466, %s465, 0
      %p468 = scmp.lt.s32.totalorder %s467, 3
      %s469 = scalar_select %p468, %s467, 3
      %p470 = scmp.lt.s32.totalorder %s21, 1
      %s471 = scalar_select %p470, %s21, 1
      %p472 = scmp.lt.s32.totalorder %s469, 3
      %s473 = scalar_select %p472, %s469, 3
      %p474 = scmp.lt.s32.totalorder %s23, 0
      %s475 = scalar_select %p474, %s23, 0
      %s476 = smul.addr %s473, 6
      %s477 = sadd.s32 %s475, %s476
      %s478 = smul.addr %s471, 24
      %s479 = sadd.s32 %s477, %s478
      %s480 = smul.addr %s479, 8
      %s481 = scalar_lea.vmem %s2, %s480
      %s482 = sadd.s32 %s22, 1
      %p483 = scmp.gt.s32.totalorder %s482, 0
      %s484 = scalar_select %p483, %s482, 0
      %p485 = scmp.lt.s32.totalorder %s484, 3
      %s486 = scalar_select %p485, %s484, 3
      %p487 = scmp.lt.s32.totalorder %s23, 0
      %s488 = scalar_select %p487, %s23, 0
      %s489 = smul.addr %s488, 4
      %s490 = scalar_lea.vmem %s3, %s489
      %p491 = scmp.lt.s32.totalorder %s23, 0
      %s492 = scalar_select %p491, %s23, 0
      %s493 = scalar_lea.vmem %s4, %s492
      %p494 = scmp.lt.s32.totalorder %s21, 1
      %s495 = scalar_select %p494, %s21, 1
      %p496 = scmp.lt.s32.totalorder %s22, 3
      %s497 = scalar_select %p496, %s22, 3
      %p498 = scmp.lt.s32.totalorder %s23, 0
      %s499 = scalar_select %p498, %s23, 0
      %s500 = smul.addr %s497, 6
      %s501 = sadd.s32 %s499, %s500
      %s502 = smul.addr %s495, 24
      %s503 = sadd.s32 %s501, %s502
      %s504 = smul.addr %s503, 8
      %s505 = scalar_lea.vmem %s5, %s504
      %v506 = vld [vmem:[%s493] sm:$0x1]
      %s507 = sadd.s32 %s22, 4294967295
      %p508 = scmp.ge.s32.totalorder %s507, 0
      %p509 = scmp.le.s32.totalorder %s507, 3
      %p510 = pnand %p508, %p509
      %p511 = pneg %p510
      %s512 = scalar_select %p511, 1, 0
      %s513 = scvt.s32.f32 %s512
      %v514 = vld [vmem:[%s490] sm:$0x1]
      %v515 = vstv %s513
      %v516 = vmul.f32 %v514, %v515
      %v517 = vld [vmem:[%s490 + $0x1] sm:$0x1]
      %v518 = vmul.f32 %v517, %v515
      %v519 = vld [vmem:[%s490 + $0x2] sm:$0x1]
      %v520 = vmul.f32 %v519, %v515
      %s521 = scalar_lea.vmem %s490, 4
      %v522 = vld [vmem:[%s521] sm:$0x1]
      %v523 = vmul.f32 %v522, %v515
      %v524 = vld [vmem:[%s521 + $0x1] sm:$0x1]
      %v525 = vmul.f32 %v524, %v515
      %v526 = vld [vmem:[%s521 + $0x2] sm:$0x1]
      %v527 = vmul.f32 %v526, %v515
      %s528 = scalar_lea.vmem %s490, 8
      %v529 = vld [vmem:[%s528] sm:$0x1]
      %v530 = vmul.f32 %v529, %v515
      %v531 = vld [vmem:[%s528 + $0x1] sm:$0x1]
      %v532 = vmul.f32 %v531, %v515
      %v533 = vld [vmem:[%s528 + $0x2] sm:$0x1]
      %v534 = vmul.f32 %v533, %v515
      %s535 = scalar_lea.vmem %s490, 12
      %v536 = vld [vmem:[%s535] sm:$0x1]
      %v537 = vld [vmem:[%s535 + $0x1] sm:$0x1]
      %v538 = vld [vmem:[%s535 + $0x2] sm:$0x1]
      %s539 = scalar_lea.vmem %s490, 16
      %v540 = vld [vmem:[%s539] sm:$0x1]
      %v541 = vld [vmem:[%s539 + $0x1] sm:$0x1]
      %v542 = vld [vmem:[%s539 + $0x2] sm:$0x1]
      %s543 = scalar_lea.vmem %s490, 20
      %v544 = vld [vmem:[%s543] sm:$0x1]
      %v545 = vld [vmem:[%s543 + $0x1] sm:$0x1]
      %v546 = vld [vmem:[%s543 + $0x2] sm:$0x1]
      %s547 = sadd.s32 %s22, 1
      %p548 = scmp.ge.s32.totalorder %s547, 0
      %p549 = scmp.le.s32.totalorder %s547, 3
      %p550 = pnand %p548, %p549
      %p551 = pneg %p550
      %s552 = scalar_select %p551, 1, 0
      %s553 = scvt.s32.f32 %s552
      %s554 = scalar_lea.vmem %s490, 24
      %v555 = vld [vmem:[%s554] sm:$0x1]
      %v556 = vstv %s553
      %v557 = vmul.f32 %v555, %v556
      %v558 = vld [vmem:[%s554 + $0x1] sm:$0x1]
      %v559 = vmul.f32 %v558, %v556
      %v560 = vld [vmem:[%s554 + $0x2] sm:$0x1]
      %v561 = vmul.f32 %v560, %v556
      %s562 = scalar_lea.vmem %s490, 28
      %v563 = vld [vmem:[%s562] sm:$0x1]
      %v564 = vmul.f32 %v563, %v556
      %v565 = vld [vmem:[%s562 + $0x1] sm:$0x1]
      %v566 = vmul.f32 %v565, %v556
      %v567 = vld [vmem:[%s562 + $0x2] sm:$0x1]
      %v568 = vmul.f32 %v567, %v556
      %s569 = scalar_lea.vmem %s490, 32
      %v570 = vld [vmem:[%s569] sm:$0x1]
      %v571 = vmul.f32 %v570, %v556
      %v572 = vld [vmem:[%s569 + $0x1] sm:$0x1]
      %v573 = vmul.f32 %v572, %v556
      %v574 = vld [vmem:[%s569 + $0x2] sm:$0x1]
      %v575 = vmul.f32 %v574, %v556
      %vm576 = vcmask 130048
      %577 = vst.msk [vmem:[#allocation2] sm:$0xff] %vm576, 0.0
      %578 = vst.msk [vmem:[#allocation2 + $0x8] sm:$0xff] %vm576, 0.0
      %579 = vst.msk [vmem:[#allocation2 + $0x10] sm:$0xff] %vm576, 0.0
      %580 = vst.msk [vmem:[#allocation2 + $0x18] sm:$0xff] %vm576, 0.0
      %581 = vst.msk [vmem:[#allocation2 + $0x20] sm:$0xff] %vm576, 0.0
      %582 = vst.msk [vmem:[#allocation2 + $0x28] sm:$0xff] %vm576, 0.0
      %583 = vst.msk [vmem:[#allocation2 + $0x30] sm:$0xff] %vm576, 0.0
      %584 = vst.msk [vmem:[#allocation2 + $0x38] sm:$0xff] %vm576, 0.0
      %585 = vst.msk [vmem:[#allocation2 + $0x40] sm:$0xff] %vm576, 0.0
      %586 = vst.msk [vmem:[#allocation2 + $0x48] sm:$0xff] %vm576, 0.0
      %587 = vst.msk [vmem:[#allocation2 + $0x50] sm:$0xff] %vm576, 0.0
      %588 = vst.msk [vmem:[#allocation2 + $0x58] sm:$0xff] %vm576, 0.0
      %589 = vst.msk [vmem:[#allocation2 + $0x60] sm:$0xff] %vm576, 0.0
      %590 = vst.msk [vmem:[#allocation2 + $0x68] sm:$0xff] %vm576, 0.0
      %591 = vst.msk [vmem:[#allocation2 + $0x70] sm:$0xff] %vm576, 0.0
      %592 = vst.msk [vmem:[#allocation2 + $0x78] sm:$0xff] %vm576, 0.0
      %593 = vst.msk [vmem:[#allocation2 + $0x80] sm:$0xff] %vm576, 0.0
      %594 = vst.msk [vmem:[#allocation2 + $0x88] sm:$0xff] %vm576, 0.0
      %595 = vst.msk [vmem:[#allocation2 + $0x90] sm:$0xff] %vm576, 0.0
      %596 = vst.msk [vmem:[#allocation2 + $0x98] sm:$0xff] %vm576, 0.0
      %597 = vst.msk [vmem:[#allocation2 + $0xa0] sm:$0xff] %vm576, 0.0
      %598 = vst.msk [vmem:[#allocation2 + $0xa8] sm:$0xff] %vm576, 0.0
      %599 = vst.msk [vmem:[#allocation2 + $0xb0] sm:$0xff] %vm576, 0.0
      %600 = vst.msk [vmem:[#allocation2 + $0xb8] sm:$0xff] %vm576, 0.0
      %v601 = vld [vmem:[%s439] sm:$0x3f]
      %v602 = vld [vmem:[%s439 + $0x8] sm:$0x3f]
      %v603 = vld [vmem:[%s439 + $0x10] sm:$0x3f]
      %v604 = vld [vmem:[%s439 + $0x18] sm:$0x3f]
      %v605 = vld [vmem:[%s439 + $0x20] sm:$0x3f]
      %v606 = vld [vmem:[%s439 + $0x28] sm:$0x3f]
      %s607 = scalar_lea.vmem [#allocation2], 8
      %vm608 = vcmask 128000
      %609 = vst.msk [vmem:[%s607 + $0x1] sm:$0x3f] %vm608, %v601
      %610 = vst.msk [vmem:[%s607 + $0x9] sm:$0x3f] %vm608, %v602
      %611 = vst.msk [vmem:[%s607 + $0x11] sm:$0x3f] %vm608, %v603
      %612 = vst.msk [vmem:[%s607 + $0x19] sm:$0x3f] %vm608, %v604
      %613 = vst.msk [vmem:[%s607 + $0x21] sm:$0x3f] %vm608, %v605
      %614 = vst.msk [vmem:[%s607 + $0x29] sm:$0x3f] %vm608, %v606
      %v615 = vld [vmem:[%s460] sm:$0x3f]
      %v616 = vld [vmem:[%s460 + $0x8] sm:$0x3f]
      %v617 = vld [vmem:[%s460 + $0x10] sm:$0x3f]
      %v618 = vld [vmem:[%s460 + $0x18] sm:$0x3f]
      %v619 = vld [vmem:[%s460 + $0x20] sm:$0x3f]
      %v620 = vld [vmem:[%s460 + $0x28] sm:$0x3f]
      %s621 = scalar_lea.vmem [#allocation2], 72
      %622 = vst.msk [vmem:[%s621 + $0x1] sm:$0x3f] %vm608, %v615
      %623 = vst.msk [vmem:[%s621 + $0x9] sm:$0x3f] %vm608, %v616
      %624 = vst.msk [vmem:[%s621 + $0x11] sm:$0x3f] %vm608, %v617
      %625 = vst.msk [vmem:[%s621 + $0x19] sm:$0x3f] %vm608, %v618
      %626 = vst.msk [vmem:[%s621 + $0x21] sm:$0x3f] %vm608, %v619
      %627 = vst.msk [vmem:[%s621 + $0x29] sm:$0x3f] %vm608, %v620
      %v628 = vld [vmem:[%s481] sm:$0x3f]
      %v629 = vld [vmem:[%s481 + $0x8] sm:$0x3f]
      %v630 = vld [vmem:[%s481 + $0x10] sm:$0x3f]
      %v631 = vld [vmem:[%s481 + $0x18] sm:$0x3f]
      %v632 = vld [vmem:[%s481 + $0x20] sm:$0x3f]
      %v633 = vld [vmem:[%s481 + $0x28] sm:$0x3f]
      %s634 = scalar_lea.vmem [#allocation2], 136
      %635 = vst.msk [vmem:[%s634 + $0x1] sm:$0x3f] %vm608, %v628
      %636 = vst.msk [vmem:[%s634 + $0x9] sm:$0x3f] %vm608, %v629
      %637 = vst.msk [vmem:[%s634 + $0x11] sm:$0x3f] %vm608, %v630
      %638 = vst.msk [vmem:[%s634 + $0x19] sm:$0x3f] %vm608, %v631
      %639 = vst.msk [vmem:[%s634 + $0x21] sm:$0x3f] %vm608, %v632
      %640 = vst.msk [vmem:[%s634 + $0x29] sm:$0x3f] %vm608, %v633
      %v642 = vlaneseq
      %v643 = vshrl.u32 %v642, 7
      %v644 = vsub.s32 0, %v643
      %v645 = vrot.slane %v506, %v644
      %v647 = vld [vmem:[#allocation2] sm:$0x3f]
      %v648 = vld [vmem:[#allocation2 + $0x8] sm:$0x3f]
      %v649 = vld [vmem:[#allocation2 + $0x10] sm:$0x3f]
      %v650 = vld [vmem:[#allocation2 + $0x18] sm:$0x3f]
      %v651 = vld [vmem:[#allocation2 + $0x20] sm:$0x3f]
      %v652 = vld [vmem:[#allocation2 + $0x28] sm:$0x3f]
      %v653 = vld [vmem:[#allocation2 + $0x30] sm:$0x3f]
      %v654 = vld [vmem:[#allocation2 + $0x38] sm:$0x3f]
      %v655 = vlaneseq
      %v656 = vshrl.u32 %v655, 7
      %v657 = vsub.s32 0, %v656
      %v658 = vrot.slane %v516, %v657
      %v659 = vmul.f32 %v647, %v658
      %v660 = vmul.f32 %v648, %v658
      %v661 = vmul.f32 %v649, %v658
      %v662 = vmul.f32 %v650, %v658
      %v663 = vmul.f32 %v651, %v658
      %v664 = vmul.f32 %v652, %v658
      %v665 = vadd.f32 %v645, %v659
      %v666 = vadd.f32 %v645, %v660
      %v667 = vadd.f32 %v645, %v661
      %v668 = vadd.f32 %v645, %v662
      %v669 = vadd.f32 %v645, %v663
      %v670 = vadd.f32 %v645, %v664
      %v671 = vlaneseq
      %v672 = vshrl.u32 %v671, 7
      %v673 = vsub.s32 0, %v672
      %v674 = vrot.slane %v523, %v673
      %v675 = vmul.f32 %v648, %v674
      %v676 = vmul.f32 %v649, %v674
      %v677 = vmul.f32 %v650, %v674
      %v678 = vmul.f32 %v651, %v674
      %v679 = vmul.f32 %v652, %v674
      %v680 = vmul.f32 %v653, %v674
      %v681 = vadd.f32 %v665, %v675
      %v682 = vadd.f32 %v666, %v676
      %v683 = vadd.f32 %v667, %v677
      %v684 = vadd.f32 %v668, %v678
      %v685 = vadd.f32 %v669, %v679
      %v686 = vadd.f32 %v670, %v680
      %v687 = vlaneseq
      %v688 = vshrl.u32 %v687, 7
      %v689 = vsub.s32 0, %v688
      %v690 = vrot.slane %v530, %v689
      %v691 = vmul.f32 %v649, %v690
      %v692 = vmul.f32 %v650, %v690
      %v693 = vmul.f32 %v651, %v690
      %v694 = vmul.f32 %v652, %v690
      %v695 = vmul.f32 %v653, %v690
      %v696 = vmul.f32 %v654, %v690
      %v697 = vadd.f32 %v681, %v691
      %v698 = vadd.f32 %v682, %v692
      %v699 = vadd.f32 %v683, %v693
      %v700 = vadd.f32 %v684, %v694
      %v701 = vadd.f32 %v685, %v695
      %v702 = vadd.f32 %v686, %v696
      %v703 = vld [vmem:[#allocation2 + $0x1] sm:$0x3f]
      %v704 = vld [vmem:[#allocation2 + $0x9] sm:$0x3f]
      %v705 = vld [vmem:[#allocation2 + $0x11] sm:$0x3f]
      %v706 = vld [vmem:[#allocation2 + $0x19] sm:$0x3f]
      %v707 = vld [vmem:[#allocation2 + $0x21] sm:$0x3f]
      %v708 = vld [vmem:[#allocation2 + $0x29] sm:$0x3f]
      %v709 = vld [vmem:[#allocation2 + $0x31] sm:$0x3f]
      %v710 = vld [vmem:[#allocation2 + $0x39] sm:$0x3f]
      %v711 = vlaneseq
      %v712 = vshrl.u32 %v711, 7
      %v713 = vsub.s32 0, %v712
      %v714 = vrot.slane %v518, %v713
      %v715 = vmul.f32 %v703, %v714
      %v716 = vmul.f32 %v704, %v714
      %v717 = vmul.f32 %v705, %v714
      %v718 = vmul.f32 %v706, %v714
      %v719 = vmul.f32 %v707, %v714
      %v720 = vmul.f32 %v708, %v714
      %v721 = vadd.f32 %v697, %v715
      %v722 = vadd.f32 %v698, %v716
      %v723 = vadd.f32 %v699, %v717
      %v724 = vadd.f32 %v700, %v718
      %v725 = vadd.f32 %v701, %v719
      %v726 = vadd.f32 %v702, %v720
      %v727 = vlaneseq
      %v728 = vshrl.u32 %v727, 7
      %v729 = vsub.s32 0, %v728
      %v730 = vrot.slane %v525, %v729
      %v731 = vmul.f32 %v704, %v730
      %v732 = vmul.f32 %v705, %v730
      %v733 = vmul.f32 %v706, %v730
      %v734 = vmul.f32 %v707, %v730
      %v735 = vmul.f32 %v708, %v730
      %v736 = vmul.f32 %v709, %v730
      %v737 = vadd.f32 %v721, %v731
      %v738 = vadd.f32 %v722, %v732
      %v739 = vadd.f32 %v723, %v733
      %v740 = vadd.f32 %v724, %v734
      %v741 = vadd.f32 %v725, %v735
      %v742 = vadd.f32 %v726, %v736
      %v743 = vlaneseq
      %v744 = vshrl.u32 %v743, 7
      %v745 = vsub.s32 0, %v744
      %v746 = vrot.slane %v532, %v745
      %v747 = vmul.f32 %v705, %v746
      %v748 = vmul.f32 %v706, %v746
      %v749 = vmul.f32 %v707, %v746
      %v750 = vmul.f32 %v708, %v746
      %v751 = vmul.f32 %v709, %v746
      %v752 = vmul.f32 %v710, %v746
      %v753 = vadd.f32 %v737, %v747
      %v754 = vadd.f32 %v738, %v748
      %v755 = vadd.f32 %v739, %v749
      %v756 = vadd.f32 %v740, %v750
      %v757 = vadd.f32 %v741, %v751
      %v758 = vadd.f32 %v742, %v752
      %v759 = vld [vmem:[#allocation2 + $0x2] sm:$0x3f]
      %v760 = vld [vmem:[#allocation2 + $0xa] sm:$0x3f]
      %v761 = vld [vmem:[#allocation2 + $0x12] sm:$0x3f]
      %v762 = vld [vmem:[#allocation2 + $0x1a] sm:$0x3f]
      %v763 = vld [vmem:[#allocation2 + $0x22] sm:$0x3f]
      %v764 = vld [vmem:[#allocation2 + $0x2a] sm:$0x3f]
      %v765 = vld [vmem:[#allocation2 + $0x32] sm:$0x3f]
      %v766 = vld [vmem:[#allocation2 + $0x3a] sm:$0x3f]
      %v767 = vlaneseq
      %v768 = vshrl.u32 %v767, 7
      %v769 = vsub.s32 0, %v768
      %v770 = vrot.slane %v520, %v769
      %v771 = vmul.f32 %v759, %v770
      %v772 = vmul.f32 %v760, %v770
      %v773 = vmul.f32 %v761, %v770
      %v774 = vmul.f32 %v762, %v770
      %v775 = vmul.f32 %v763, %v770
      %v776 = vmul.f32 %v764, %v770
      %v777 = vadd.f32 %v753, %v771
      %v778 = vadd.f32 %v754, %v772
      %v779 = vadd.f32 %v755, %v773
      %v780 = vadd.f32 %v756, %v774
      %v781 = vadd.f32 %v757, %v775
      %v782 = vadd.f32 %v758, %v776
      %v783 = vlaneseq
      %v784 = vshrl.u32 %v783, 7
      %v785 = vsub.s32 0, %v784
      %v786 = vrot.slane %v527, %v785
      %v787 = vmul.f32 %v760, %v786
      %v788 = vmul.f32 %v761, %v786
      %v789 = vmul.f32 %v762, %v786
      %v790 = vmul.f32 %v763, %v786
      %v791 = vmul.f32 %v764, %v786
      %v792 = vmul.f32 %v765, %v786
      %v793 = vadd.f32 %v777, %v787
      %v794 = vadd.f32 %v778, %v788
      %v795 = vadd.f32 %v779, %v789
      %v796 = vadd.f32 %v780, %v790
      %v797 = vadd.f32 %v781, %v791
      %v798 = vadd.f32 %v782, %v792
      %v799 = vlaneseq
      %v800 = vshrl.u32 %v799, 7
      %v801 = vsub.s32 0, %v800
      %v802 = vrot.slane %v534, %v801
      %v803 = vmul.f32 %v761, %v802
      %v804 = vmul.f32 %v762, %v802
      %v805 = vmul.f32 %v763, %v802
      %v806 = vmul.f32 %v764, %v802
      %v807 = vmul.f32 %v765, %v802
      %v808 = vmul.f32 %v766, %v802
      %v809 = vadd.f32 %v793, %v803
      %v810 = vadd.f32 %v794, %v804
      %v811 = vadd.f32 %v795, %v805
      %v812 = vadd.f32 %v796, %v806
      %v813 = vadd.f32 %v797, %v807
      %v814 = vadd.f32 %v798, %v808
      %s815 = scalar_lea.vmem [#allocation2], 64
      %v816 = vld [vmem:[%s815] sm:$0x3f]
      %v817 = vld [vmem:[%s815 + $0x8] sm:$0x3f]
      %v818 = vld [vmem:[%s815 + $0x10] sm:$0x3f]
      %v819 = vld [vmem:[%s815 + $0x18] sm:$0x3f]
      %v820 = vld [vmem:[%s815 + $0x20] sm:$0x3f]
      %v821 = vld [vmem:[%s815 + $0x28] sm:$0x3f]
      %v822 = vld [vmem:[%s815 + $0x30] sm:$0x3f]
      %v823 = vld [vmem:[%s815 + $0x38] sm:$0x3f]
      %v824 = vlaneseq
      %v825 = vshrl.u32 %v824, 7
      %v826 = vsub.s32 0, %v825
      %v827 = vrot.slane %v536, %v826
      %v828 = vmul.f32 %v816, %v827
      %v829 = vmul.f32 %v817, %v827
      %v830 = vmul.f32 %v818, %v827
      %v831 = vmul.f32 %v819, %v827
      %v832 = vmul.f32 %v820, %v827
      %v833 = vmul.f32 %v821, %v827
      %v834 = vadd.f32 %v809, %v828
      %v835 = vadd.f32 %v810, %v829
      %v836 = vadd.f32 %v811, %v830
      %v837 = vadd.f32 %v812, %v831
      %v838 = vadd.f32 %v813, %v832
      %v839 = vadd.f32 %v814, %v833
      %v840 = vlaneseq
      %v841 = vshrl.u32 %v840, 7
      %v842 = vsub.s32 0, %v841
      %v843 = vrot.slane %v540, %v842
      %v844 = vmul.f32 %v817, %v843
      %v845 = vmul.f32 %v818, %v843
      %v846 = vmul.f32 %v819, %v843
      %v847 = vmul.f32 %v820, %v843
      %v848 = vmul.f32 %v821, %v843
      %v849 = vmul.f32 %v822, %v843
      %v850 = vadd.f32 %v834, %v844
      %v851 = vadd.f32 %v835, %v845
      %v852 = vadd.f32 %v836, %v846
      %v853 = vadd.f32 %v837, %v847
      %v854 = vadd.f32 %v838, %v848
      %v855 = vadd.f32 %v839, %v849
      %v856 = vlaneseq
      %v857 = vshrl.u32 %v856, 7
      %v858 = vsub.s32 0, %v857
      %v859 = vrot.slane %v544, %v858
      %v860 = vmul.f32 %v818, %v859
      %v861 = vmul.f32 %v819, %v859
      %v862 = vmul.f32 %v820, %v859
      %v863 = vmul.f32 %v821, %v859
      %v864 = vmul.f32 %v822, %v859
      %v865 = vmul.f32 %v823, %v859
      %v866 = vadd.f32 %v850, %v860
      %v867 = vadd.f32 %v851, %v861
      %v868 = vadd.f32 %v852, %v862
      %v869 = vadd.f32 %v853, %v863
      %v870 = vadd.f32 %v854, %v864
      %v871 = vadd.f32 %v855, %v865
      %v872 = vld [vmem:[%s815 + $0x1] sm:$0x3f]
      %v873 = vld [vmem:[%s815 + $0x9] sm:$0x3f]
      %v874 = vld [vmem:[%s815 + $0x11] sm:$0x3f]
      %v875 = vld [vmem:[%s815 + $0x19] sm:$0x3f]
      %v876 = vld [vmem:[%s815 + $0x21] sm:$0x3f]
      %v877 = vld [vmem:[%s815 + $0x29] sm:$0x3f]
      %v878 = vld [vmem:[%s815 + $0x31] sm:$0x3f]
      %v879 = vld [vmem:[%s815 + $0x39] sm:$0x3f]
      %v880 = vlaneseq
      %v881 = vshrl.u32 %v880, 7
      %v882 = vsub.s32 0, %v881
      %v883 = vrot.slane %v537, %v882
      %v884 = vmul.f32 %v872, %v883
      %v885 = vmul.f32 %v873, %v883
      %v886 = vmul.f32 %v874, %v883
      %v887 = vmul.f32 %v875, %v883
      %v888 = vmul.f32 %v876, %v883
      %v889 = vmul.f32 %v877, %v883
      %v890 = vadd.f32 %v866, %v884
      %v891 = vadd.f32 %v867, %v885
      %v892 = vadd.f32 %v868, %v886
      %v893 = vadd.f32 %v869, %v887
      %v894 = vadd.f32 %v870, %v888
      %v895 = vadd.f32 %v871, %v889
      %v896 = vlaneseq
      %v897 = vshrl.u32 %v896, 7
      %v898 = vsub.s32 0, %v897
      %v899 = vrot.slane %v541, %v898
      %v900 = vmul.f32 %v873, %v899
      %v901 = vmul.f32 %v874, %v899
      %v902 = vmul.f32 %v875, %v899
      %v903 = vmul.f32 %v876, %v899
      %v904 = vmul.f32 %v877, %v899
      %v905 = vmul.f32 %v878, %v899
      %v906 = vadd.f32 %v890, %v900
      %v907 = vadd.f32 %v891, %v901
      %v908 = vadd.f32 %v892, %v902
      %v909 = vadd.f32 %v893, %v903
      %v910 = vadd.f32 %v894, %v904
      %v911 = vadd.f32 %v895, %v905
      %v912 = vlaneseq
      %v913 = vshrl.u32 %v912, 7
      %v914 = vsub.s32 0, %v913
      %v915 = vrot.slane %v545, %v914
      %v916 = vmul.f32 %v874, %v915
      %v917 = vmul.f32 %v875, %v915
      %v918 = vmul.f32 %v876, %v915
      %v919 = vmul.f32 %v877, %v915
      %v920 = vmul.f32 %v878, %v915
      %v921 = vmul.f32 %v879, %v915
      %v922 = vadd.f32 %v906, %v916
      %v923 = vadd.f32 %v907, %v917
      %v924 = vadd.f32 %v908, %v918
      %v925 = vadd.f32 %v909, %v919
      %v926 = vadd.f32 %v910, %v920
      %v927 = vadd.f32 %v911, %v921
      %v928 = vld [vmem:[%s815 + $0x2] sm:$0x3f]
      %v929 = vld [vmem:[%s815 + $0xa] sm:$0x3f]
      %v930 = vld [vmem:[%s815 + $0x12] sm:$0x3f]
      %v931 = vld [vmem:[%s815 + $0x1a] sm:$0x3f]
      %v932 = vld [vmem:[%s815 + $0x22] sm:$0x3f]
      %v933 = vld [vmem:[%s815 + $0x2a] sm:$0x3f]
      %v934 = vld [vmem:[%s815 + $0x32] sm:$0x3f]
      %v935 = vld [vmem:[%s815 + $0x3a] sm:$0x3f]
      %v936 = vlaneseq
      %v937 = vshrl.u32 %v936, 7
      %v938 = vsub.s32 0, %v937
      %v939 = vrot.slane %v538, %v938
      %v940 = vmul.f32 %v928, %v939
      %v941 = vmul.f32 %v929, %v939
      %v942 = vmul.f32 %v930, %v939
      %v943 = vmul.f32 %v931, %v939
      %v944 = vmul.f32 %v932, %v939
      %v945 = vmul.f32 %v933, %v939
      %v946 = vadd.f32 %v922, %v940
      %v947 = vadd.f32 %v923, %v941
      %v948 = vadd.f32 %v924, %v942
      %v949 = vadd.f32 %v925, %v943
      %v950 = vadd.f32 %v926, %v944
      %v951 = vadd.f32 %v927, %v945
      %v952 = vlaneseq
      %v953 = vshrl.u32 %v952, 7
      %v954 = vsub.s32 0, %v953
      %v955 = vrot.slane %v542, %v954
      %v956 = vmul.f32 %v929, %v955
      %v957 = vmul.f32 %v930, %v955
      %v958 = vmul.f32 %v931, %v955
      %v959 = vmul.f32 %v932, %v955
      %v960 = vmul.f32 %v933, %v955
      %v961 = vmul.f32 %v934, %v955
      %v962 = vadd.f32 %v946, %v956
      %v963 = vadd.f32 %v947, %v957
      %v964 = vadd.f32 %v948, %v958
      %v965 = vadd.f32 %v949, %v959
      %v966 = vadd.f32 %v950, %v960
      %v967 = vadd.f32 %v951, %v961
      %v968 = vlaneseq
      %v969 = vshrl.u32 %v968, 7
      %v970 = vsub.s32 0, %v969
      %v971 = vrot.slane %v546, %v970
      %v972 = vmul.f32 %v930, %v971
      %v973 = vmul.f32 %v931, %v971
      %v974 = vmul.f32 %v932, %v971
      %v975 = vmul.f32 %v933, %v971
      %v976 = vmul.f32 %v934, %v971
      %v977 = vmul.f32 %v935, %v971
      %v978 = vadd.f32 %v962, %v972
      %v979 = vadd.f32 %v963, %v973
      %v980 = vadd.f32 %v964, %v974
      %v981 = vadd.f32 %v965, %v975
      %v982 = vadd.f32 %v966, %v976
      %v983 = vadd.f32 %v967, %v977
      %s984 = scalar_lea.vmem [#allocation2], 128
      %v985 = vld [vmem:[%s984] sm:$0x3f]
      %v986 = vld [vmem:[%s984 + $0x8] sm:$0x3f]
      %v987 = vld [vmem:[%s984 + $0x10] sm:$0x3f]
      %v988 = vld [vmem:[%s984 + $0x18] sm:$0x3f]
      %v989 = vld [vmem:[%s984 + $0x20] sm:$0x3f]
      %v990 = vld [vmem:[%s984 + $0x28] sm:$0x3f]
      %v991 = vld [vmem:[%s984 + $0x30] sm:$0x3f]
      %v992 = vld [vmem:[%s984 + $0x38] sm:$0x3f]
      %v993 = vlaneseq
      %v994 = vshrl.u32 %v993, 7
      %v995 = vsub.s32 0, %v994
      %v996 = vrot.slane %v557, %v995
      %v997 = vmul.f32 %v985, %v996
      %v998 = vmul.f32 %v986, %v996
      %v999 = vmul.f32 %v987, %v996
      %v1000 = vmul.f32 %v988, %v996
      %v1001 = vmul.f32 %v989, %v996
      %v1002 = vmul.f32 %v990, %v996
      %v1003 = vadd.f32 %v978, %v997
      %v1004 = vadd.f32 %v979, %v998
      %v1005 = vadd.f32 %v980, %v999
      %v1006 = vadd.f32 %v981, %v1000
      %v1007 = vadd.f32 %v982, %v1001
      %v1008 = vadd.f32 %v983, %v1002
      %v1009 = vlaneseq
      %v1010 = vshrl.u32 %v1009, 7
      %v1011 = vsub.s32 0, %v1010
      %v1012 = vrot.slane %v564, %v1011
      %v1013 = vmul.f32 %v986, %v1012
      %v1014 = vmul.f32 %v987, %v1012
      %v1015 = vmul.f32 %v988, %v1012
      %v1016 = vmul.f32 %v989, %v1012
      %v1017 = vmul.f32 %v990, %v1012
      %v1018 = vmul.f32 %v991, %v1012
      %v1019 = vadd.f32 %v1003, %v1013
      %v1020 = vadd.f32 %v1004, %v1014
      %v1021 = vadd.f32 %v1005, %v1015
      %v1022 = vadd.f32 %v1006, %v1016
      %v1023 = vadd.f32 %v1007, %v1017
      %v1024 = vadd.f32 %v1008, %v1018
      %v1025 = vlaneseq
      %v1026 = vshrl.u32 %v1025, 7
      %v1027 = vsub.s32 0, %v1026
      %v1028 = vrot.slane %v571, %v1027
      %v1029 = vmul.f32 %v987, %v1028
      %v1030 = vmul.f32 %v988, %v1028
      %v1031 = vmul.f32 %v989, %v1028
      %v1032 = vmul.f32 %v990, %v1028
      %v1033 = vmul.f32 %v991, %v1028
      %v1034 = vmul.f32 %v992, %v1028
      %v1035 = vadd.f32 %v1019, %v1029
      %v1036 = vadd.f32 %v1020, %v1030
      %v1037 = vadd.f32 %v1021, %v1031
      %v1038 = vadd.f32 %v1022, %v1032
      %v1039 = vadd.f32 %v1023, %v1033
      %v1040 = vadd.f32 %v1024, %v1034
      %v1041 = vld [vmem:[%s984 + $0x1] sm:$0x3f]
      %v1042 = vld [vmem:[%s984 + $0x9] sm:$0x3f]
      %v1043 = vld [vmem:[%s984 + $0x11] sm:$0x3f]
      %v1044 = vld [vmem:[%s984 + $0x19] sm:$0x3f]
      %v1045 = vld [vmem:[%s984 + $0x21] sm:$0x3f]
      %v1046 = vld [vmem:[%s984 + $0x29] sm:$0x3f]
      %v1047 = vld [vmem:[%s984 + $0x31] sm:$0x3f]
      %v1048 = vld [vmem:[%s984 + $0x39] sm:$0x3f]
      %v1049 = vlaneseq
      %v1050 = vshrl.u32 %v1049, 7
      %v1051 = vsub.s32 0, %v1050
      %v1052 = vrot.slane %v559, %v1051
      %v1053 = vmul.f32 %v1041, %v1052
      %v1054 = vmul.f32 %v1042, %v1052
      %v1055 = vmul.f32 %v1043, %v1052
      %v1056 = vmul.f32 %v1044, %v1052
      %v1057 = vmul.f32 %v1045, %v1052
      %v1058 = vmul.f32 %v1046, %v1052
      %v1059 = vadd.f32 %v1035, %v1053
      %v1060 = vadd.f32 %v1036, %v1054
      %v1061 = vadd.f32 %v1037, %v1055
      %v1062 = vadd.f32 %v1038, %v1056
      %v1063 = vadd.f32 %v1039, %v1057
      %v1064 = vadd.f32 %v1040, %v1058
      %v1065 = vlaneseq
      %v1066 = vshrl.u32 %v1065, 7
      %v1067 = vsub.s32 0, %v1066
      %v1068 = vrot.slane %v566, %v1067
      %v1069 = vmul.f32 %v1042, %v1068
      %v1070 = vmul.f32 %v1043, %v1068
      %v1071 = vmul.f32 %v1044, %v1068
      %v1072 = vmul.f32 %v1045, %v1068
      %v1073 = vmul.f32 %v1046, %v1068
      %v1074 = vmul.f32 %v1047, %v1068
      %v1075 = vadd.f32 %v1059, %v1069
      %v1076 = vadd.f32 %v1060, %v1070
      %v1077 = vadd.f32 %v1061, %v1071
      %v1078 = vadd.f32 %v1062, %v1072
      %v1079 = vadd.f32 %v1063, %v1073
      %v1080 = vadd.f32 %v1064, %v1074
      %v1081 = vlaneseq
      %v1082 = vshrl.u32 %v1081, 7
      %v1083 = vsub.s32 0, %v1082
      %v1084 = vrot.slane %v573, %v1083
      %v1085 = vmul.f32 %v1043, %v1084
      %v1086 = vmul.f32 %v1044, %v1084
      %v1087 = vmul.f32 %v1045, %v1084
      %v1088 = vmul.f32 %v1046, %v1084
      %v1089 = vmul.f32 %v1047, %v1084
      %v1090 = vmul.f32 %v1048, %v1084
      %v1091 = vadd.f32 %v1075, %v1085
      %v1092 = vadd.f32 %v1076, %v1086
      %v1093 = vadd.f32 %v1077, %v1087
      %v1094 = vadd.f32 %v1078, %v1088
      %v1095 = vadd.f32 %v1079, %v1089
      %v1096 = vadd.f32 %v1080, %v1090
      %v1097 = vld [vmem:[%s984 + $0x2] sm:$0x3f]
      %v1098 = vld [vmem:[%s984 + $0xa] sm:$0x3f]
      %v1099 = vld [vmem:[%s984 + $0x12] sm:$0x3f]
      %v1100 = vld [vmem:[%s984 + $0x1a] sm:$0x3f]
      %v1101 = vld [vmem:[%s984 + $0x22] sm:$0x3f]
      %v1102 = vld [vmem:[%s984 + $0x2a] sm:$0x3f]
      %v1103 = vld [vmem:[%s984 + $0x32] sm:$0x3f]
      %v1104 = vld [vmem:[%s984 + $0x3a] sm:$0x3f]
      %v1105 = vlaneseq
      %v1106 = vshrl.u32 %v1105, 7
      %v1107 = vsub.s32 0, %v1106
      %v1108 = vrot.slane %v561, %v1107
      %v1109 = vmul.f32 %v1097, %v1108
      %v1110 = vmul.f32 %v1098, %v1108
      %v1111 = vmul.f32 %v1099, %v1108
      %v1112 = vmul.f32 %v1100, %v1108
      %v1113 = vmul.f32 %v1101, %v1108
      %v1114 = vmul.f32 %v1102, %v1108
      %v1115 = vadd.f32 %v1091, %v1109
      %v1116 = vadd.f32 %v1092, %v1110
      %v1117 = vadd.f32 %v1093, %v1111
      %v1118 = vadd.f32 %v1094, %v1112
      %v1119 = vadd.f32 %v1095, %v1113
      %v1120 = vadd.f32 %v1096, %v1114
      %v1121 = vlaneseq
      %v1122 = vshrl.u32 %v1121, 7
      %v1123 = vsub.s32 0, %v1122
      %v1124 = vrot.slane %v568, %v1123
      %v1125 = vmul.f32 %v1098, %v1124
      %v1126 = vmul.f32 %v1099, %v1124
      %v1127 = vmul.f32 %v1100, %v1124
      %v1128 = vmul.f32 %v1101, %v1124
      %v1129 = vmul.f32 %v1102, %v1124
      %v1130 = vmul.f32 %v1103, %v1124
      %v1131 = vadd.f32 %v1115, %v1125
      %v1132 = vadd.f32 %v1116, %v1126
      %v1133 = vadd.f32 %v1117, %v1127
      %v1134 = vadd.f32 %v1118, %v1128
      %v1135 = vadd.f32 %v1119, %v1129
      %v1136 = vadd.f32 %v1120, %v1130
      %v1137 = vlaneseq
      %v1138 = vshrl.u32 %v1137, 7
      %v1139 = vsub.s32 0, %v1138
      %v1140 = vrot.slane %v575, %v1139
      %v1141 = vmul.f32 %v1099, %v1140
      %v1142 = vmul.f32 %v1100, %v1140
      %v1143 = vmul.f32 %v1101, %v1140
      %v1144 = vmul.f32 %v1102, %v1140
      %v1145 = vmul.f32 %v1103, %v1140
      %v1146 = vmul.f32 %v1104, %v1140
      %v1147 = vadd.f32 %v1131, %v1141
      %v1148 = vadd.f32 %v1132, %v1142
      %v1149 = vadd.f32 %v1133, %v1143
      %v1150 = vadd.f32 %v1134, %v1144
      %v1151 = vadd.f32 %v1135, %v1145
      %v1152 = vadd.f32 %v1136, %v1146
      %1153 = vst.msk [vmem:[%s505] sm:$0x3f] %vm608, %v1147
      %1154 = vst.msk [vmem:[%s505 + $0x8] sm:$0x3f] %vm608, %v1148
      %1155 = vst.msk [vmem:[%s505 + $0x10] sm:$0x3f] %vm608, %v1149
      %1156 = vst.msk [vmem:[%s505 + $0x18] sm:$0x3f] %vm608, %v1150
      %1157 = vst.msk [vmem:[%s505 + $0x20] sm:$0x3f] %vm608, %v1151
      %1158 = vst.msk [vmem:[%s505 + $0x28] sm:$0x3f] %vm608, %v1152
      %p1159 = scmp.lt.s32.totalorder %s21, 1
      %s1160 = scalar_select %p1159, %s21, 1
      %p1161 = scmp.lt.s32.totalorder %s22, 3
      %s1162 = scalar_select %p1161, %s22, 3
      %p1163 = scmp.lt.s32.totalorder %s23, 0
      %s1164 = scalar_select %p1163, %s23, 0
      %s1165 = smul.addr %s1162, 6
      %s1166 = sadd.s32 %s1164, %s1165
      %s1167 = smul.addr %s1160, 24
      %s1168 = sadd.s32 %s1166, %s1167
      %s1169 = smul.addr %s1168, 8
      %s1170 = scalar_lea.vmem %s5, %s1169
      // Predicated region
      $region41: #{tpu_custom_call.1} parent=39 // pred_check
        %p1171 = pneg %p227
      $region42: #{tpu_custom_call.1} parent=39 // pred_check_branch
        %1173 = sbr.rel (%p1171) target = $region44
      $region43: #{tpu_custom_call.1} parent=39 // pred_region
        _
      $region44: #{tpu_custom_call.1} parent=39 // pred_fallthru
        _
    $region40: #{tpu_custom_call.1} parent=5 // pred_fallthru
      _
    %p1174 = scmp.le.s32.totalorder 2, %s11
    // Predicated region
    $region45: #{tpu_custom_call.1} parent=5 // pred_check
      %p1175 = pneg %p1174
    $region46: #{tpu_custom_call.1} parent=5 // pred_check_branch
      %1177 = sbr.rel (%p1175) target = $region48
    $region47: #{tpu_custom_call.1} parent=5 // pred_region
      %s1178 = ssub.s32 %s11, 2
      // Predicated region
      $region49: #{tpu_custom_call.1} parent=47 // pred_check
        %p1179 = pneg %p233
      $region50: #{tpu_custom_call.1} parent=47 // pred_check_branch
        %1181 = sbr.rel (%p1179) target = $region52
      $region51: #{tpu_custom_call.1} parent=47 // pred_region
        %p1182 = scmp.lt.s32.totalorder %s24, 1
        %s1183 = scalar_select %p1182, %s24, 1
        %p1184 = scmp.lt.s32.totalorder %s25, 3
        %s1185 = scalar_select %p1184, %s25, 3
        %p1186 = scmp.lt.s32.totalorder %s26, 0
        %s1187 = scalar_select %p1186, %s26, 0
        %s1188 = smul.addr %s1185, 6
        %s1189 = sadd.s32 %s1187, %s1188
        %s1190 = smul.addr %s1183, 24
        %s1191 = sadd.s32 %s1189, %s1190
        %s1192 = smul.addr %s1191, 8
        %s1193 = scalar_lea.vmem %s5, %s1192
      $region52: #{tpu_custom_call.1} parent=47 // pred_fallthru
        _
    $region48: #{tpu_custom_call.1} parent=5 // pred_fallthru
      _
  $region6: #{tpu_custom_call.1} parent=0 // loop_footer
    %s15 = sadd.s32 1, %s11
  $region7: #{tpu_custom_call.1} parent=0 // loop_footer_branch
    %10 = sbr.rel target = $region3
  $region8: #{tpu_custom_call.1} parent=0 // loop_exit
    _

</llo_original>
